<compile_context>
chip_gen: v7x
topology: tpu7x:2x2x1
jax: 0.10.0
libtpu: 0.0.40
codegen_flags: <defaults>
</compile_context>

<pallas_src>
import numpy as np
import jax
import jax.numpy as jnp
from jax.experimental import pallas as pl
from jax.experimental.pallas import tpu as pltpu

# ---- problem sizes ------------------------------------------------------------------
N, C, H, W = 2, 4, 16, 16            # batch, channels, spatial
K = 10                               # number of classes
D = C * H * W                        # flattened feature dim (raw NCHW order) = 1024
W1, W2, W3 = 0.5, 0.3, 0.2           # ensemble weights w1, w2, w3

HP, WP = H + 2, W + 2                # symmetric-padded spatial dims = 18, 18
PHW = HP * WP                        # padded per-channel flat size  = 324
LPAD = 384                           # lane-aligned per-channel width (3 * 128)
ROWS = C * N                         # sublane rows of the median layout = 8

# 3x3-window deltas in the padded per-channel flat layout.  The set is symmetric under
# negation and (see assert) no roll can wrap onto a lane we actually use, so the
# per-lane value multiset -- hence the median -- is independent of roll direction.
_DELTAS = [(di - 1) * WP + (dj - 1) for di in range(3) for dj in range(3)]
_MAX_D = max(abs(d) for d in _DELTAS)
_P_MIN, _P_MAX = WP + 1, H * WP + W          # first / last interior flat lane index
assert _P_MIN - _MAX_D >= 0 and _P_MAX + _MAX_D < LPAD

# Paeth/Devillard 19-exchange median-of-9 network (median ends in p[4]).
_MEDIAN9_NET = [(1, 2), (4, 5), (7, 8), (0, 1), (3, 4), (6, 7),
                (1, 2), (4, 5), (7, 8), (0, 3), (5, 8), (4, 7),
                (3, 6), (1, 4), (2, 5), (4, 7), (4, 2), (6, 4), (4, 2)]


# ---- the single fused kernel ---------------------------------------------------------
def _fused_kernel(xp_ref, xf_ref, w1_ref, w23_ref, b_ref, o_ref):
    # xp_ref : (C*N, LPAD)  f32  symmetric-padded channel images, row = c*N + n
    # xf_ref : (N, D)       f32  raw input, natural NCHW flatten
    # w1_ref : (C*LPAD, K)  bf16 model1 weights scattered to the padded layout
    # w23_ref: (D, 2*K)     bf16 [w2 | w3] at their natural shape
    # b_ref  : (1, 3*K)     f32  [b1 | b2 | b3]
    # o_ref  : (N, K)       f32  weighted ensemble probabilities
    xp = xp_ref[...]

    # Nine 3x3-window shifts via XLU lane rotations ((8,384) f32 = 3 vregs per copy).
    p = [xp if d == 0 else pltpu.roll(xp, d % LPAD, axis=1) for d in _DELTAS]

    def _sort2(i, j):
        a, b = p[i], p[j]
        p[i] = jnp.minimum(a, b)
        p[j] = jnp.maximum(a, b)

    for (i, j) in _MEDIAN9_NET:
        _sort2(i, j)
    med = p[4]                        # median at every interior lane, (C*N, LPAD) f32

    b = b_ref[...]                    # (1, 3K)

    # Head 1 (smoothed input): per-channel partial matmuls.  Rows c*N:(c+1)*N of the
    # median hit the matching LPAD-row block of w1; non-interior lanes hit zero rows.
    logits1 = None
    for c in range(C):
        part = jnp.dot(med[c * N:(c + 1) * N, :].astype(jnp.bfloat16),
                       w1_ref[c * LPAD:(c + 1) * LPAD, :],
                       preferred_element_type=jnp.float32)
        logits1 = part if logits1 is None else logits1 + part
    logits1 = logits1 + b[:, 0:K]

    # Heads 2 & 3 (raw input): one dot against the compact [w2 | w3] weights.
    logits23 = jnp.dot(xf_ref[...].astype(jnp.bfloat16), w23_ref[...],
                       preferred_element_type=jnp.float32)
    logits2 = logits23[:, 0:K] + b[:, K:2 * K]
    logits3 = logits23[:, K:2 * K] + b[:, 2 * K:3 * K]

    def _softmax(l):                  # exact normalisation (cost negligible here)
        e = jnp.exp(l - jnp.max(l, axis=1, keepdims=True))
        return e / jnp.sum(e, axis=1, keepdims=True)

    o_ref[...] = (W1 * _softmax(logits1) + W2 * _softmax(logits2)
                  + W3 * _softmax(logits3)).astype(o_ref.dtype)


# ---- parameter packing (trace-time / one-off, outside the kernel) --------------------
def _w1_scatter_rows():
    # natural feature d = c*H*W + i*W + j  ->  padded row  c*LPAD + (i+1)*WP + (j+1)
    c = np.arange(C).reshape(C, 1, 1)
    i = np.arange(H).reshape(1, H, 1)
    j = np.arange(W).reshape(1, 1, W)
    return (c * LPAD + (i + 1) * WP + (j + 1)).reshape(-1)          # (D,)


def pack_params(params):
    """((w,b) x 3), w:(D,K) b:(1,K) -> w1s:(C*LPAD,K) bf16, w23:(D,2K) bf16, b:(1,3K) f32."""
    (w1, b1), (w2, b2), (w3, b3) = params
    rows = jnp.asarray(_w1_scatter_rows())
    w1s = jnp.zeros((C * LPAD, K), jnp.bfloat16).at[rows].set(w1.astype(jnp.bfloat16))
    w23 = jnp.concatenate([w2, w3], axis=1).astype(jnp.bfloat16)
    b_all = jnp.concatenate([b1, b2, b3], axis=1).astype(jnp.float32)
    return w1s, w23, b_all


# ---- forward wrapper ------------------------------------------------------------------
def ensemble_forward(x, w1s, w23, b_all):
    # Symmetric pad (== scipy 'reflect' for width 1) for the 3x3 median, then lay each
    # (channel, batch) image out as one full sublane row, lane-padded to 384.
    xpad = jnp.pad(x, ((0, 0), (0, 0), (1, 1), (1, 1)), mode="symmetric")
    xp = jnp.transpose(xpad, (1, 0, 2, 3)).reshape(ROWS, PHW)
    xp = jnp.pad(xp, ((0, 0), (0, LPAD - PHW)))
    xf = x.reshape(N, D)

    return pl.pallas_call(
        _fused_kernel,
        out_shape=jax.ShapeDtypeStruct((N, K), jnp.float32),
        grid=(1,),
        in_specs=[pl.BlockSpec((ROWS, LPAD), lambda i: (0, 0)),
                  pl.BlockSpec((N, D), lambda i: (0, 0)),
                  pl.BlockSpec((C * LPAD, K), lambda i: (0, 0)),
                  pl.BlockSpec((D, 2 * K), lambda i: (0, 0)),
                  pl.BlockSpec((1, 3 * K), lambda i: (0, 0))],
        out_specs=pl.BlockSpec((N, K), lambda i: (0, 0)),
        compiler_params=pltpu.CompilerParams(dimension_semantics=("arbitrary",)),
    )(xp, xf, w1s, w23, b_all)


# ---- deterministic parameter init -------------------------------------------------------
def init_params(key):
    ks = jax.random.split(key, 6)

    def linear(kw, kb):
        w = jax.random.normal(kw, (D, K), jnp.float32) * 0.02
        b = jax.random.normal(kb, (1, K), jnp.float32) * 0.01
        return w, b

    return (linear(ks[0], ks[1]), linear(ks[2], ks[3]), linear(ks[4], ks[5]))


# ---- pure-JAX reference (for correctness check) -----------------------------------------
def reference_forward(x, params):
    (w1, b1), (w2, b2), (w3, b3) = params
    xp = jnp.pad(x, ((0, 0), (0, 0), (1, 1), (1, 1)), mode="symmetric")
    wins = jnp.stack([xp[:, :, di:di + H, dj:dj + W]
                      for di in range(3) for dj in range(3)], axis=0)
    xs = jnp.sort(wins, axis=0)[4]                       # 3x3 median

    def head(inp, w, b):
        return jax.nn.softmax(inp.reshape(N, D) @ w + b, axis=1)

    return W1 * head(xs, w1, b1) + W2 * head(x, w2, b2) + W3 * head(x, w3, b3)


if __name__ == "__main__":
    key = jax.random.PRNGKey(0)
    kx, kp = jax.random.split(key)
    x = jax.random.normal(kx, (N, C, H, W), jnp.float32)
    params = init_params(kp)
    w1s, w23, b_all = pack_params(params)

    fwd = jax.jit(ensemble_forward)
    out = fwd(x, w1s, w23, b_all)
    jax.block_until_ready(out)

    ref = reference_forward(x, params)

    assert out.shape == (N, K)
    assert bool(jnp.all(jnp.isfinite(out)))
    # weighted sum of three softmaxes -> rows sum to w1+w2+w3 = 1.0
    assert bool(jnp.allclose(jnp.sum(out, axis=1), 1.0, atol=5e-3))
    assert bool(jnp.allclose(out, ref, atol=1e-2))
    print("KERNEL_OK")
</pallas_src>

<mosaic_0001>
module attributes {stable_mosaic.version = 11 : i64} {
  func.func @_fused_kernel(%arg0: i32, %arg1: memref<8x384xf32, #tpu.memory_space<vmem>>, %arg2: memref<2x1024xf32, #tpu.memory_space<vmem>>, %arg3: memref<1536x10xbf16, #tpu.memory_space<vmem>>, %arg4: memref<1024x20xbf16, #tpu.memory_space<vmem>>, %arg5: memref<1x30xf32, #tpu.memory_space<vmem>>, %arg6: memref<2x10xf32, #tpu.memory_space<vmem>>) attributes {dimension_semantics = [#tpu.dimension_semantics<arbitrary>], iteration_bounds = array<i64: 1>, scalar_prefetch = 0 : i64, scratch_operands = 0 : i64, tpu.core_type = #tpu.core_type<tc>, window_params = [{pipeline_mode = #tpu.pipeline_mode<synchronous>, transform_indices = @transform_0, window_bounds = array<i64: 8, 384>}, {pipeline_mode = #tpu.pipeline_mode<synchronous>, transform_indices = @transform_1, window_bounds = array<i64: 2, 1024>}, {pipeline_mode = #tpu.pipeline_mode<synchronous>, transform_indices = @transform_2, window_bounds = array<i64: 1536, 10>}, {pipeline_mode = #tpu.pipeline_mode<synchronous>, transform_indices = @transform_3, window_bounds = array<i64: 1024, 20>}, {pipeline_mode = #tpu.pipeline_mode<synchronous>, transform_indices = @transform_4, window_bounds = array<i64: 1, 30>}, {pipeline_mode = #tpu.pipeline_mode<synchronous>, transform_indices = @transform_5, window_bounds = array<i64: 2, 10>}]} {
    %c0 = arith.constant 0 : index
    %c0_0 = arith.constant 0 : index
    %0 = vector.load %arg1[%c0, %c0_0] : memref<8x384xf32, #tpu.memory_space<vmem>>, vector<8x384xf32>
    %c365_i32 = arith.constant 365 : i32
    %1 = tpu.dynamic_rotate %0 by %c365_i32 dim 1 : vector<8x384xf32>, i32 -> vector<8x384xf32>
    %c366_i32 = arith.constant 366 : i32
    %2 = tpu.dynamic_rotate %0 by %c366_i32 dim 1 : vector<8x384xf32>, i32 -> vector<8x384xf32>
    %c367_i32 = arith.constant 367 : i32
    %3 = tpu.dynamic_rotate %0 by %c367_i32 dim 1 : vector<8x384xf32>, i32 -> vector<8x384xf32>
    %c383_i32 = arith.constant 383 : i32
    %4 = tpu.dynamic_rotate %0 by %c383_i32 dim 1 : vector<8x384xf32>, i32 -> vector<8x384xf32>
    %c1_i32 = arith.constant 1 : i32
    %5 = tpu.dynamic_rotate %0 by %c1_i32 dim 1 : vector<8x384xf32>, i32 -> vector<8x384xf32>
    %c17_i32 = arith.constant 17 : i32
    %6 = tpu.dynamic_rotate %0 by %c17_i32 dim 1 : vector<8x384xf32>, i32 -> vector<8x384xf32>
    %c18_i32 = arith.constant 18 : i32
    %7 = tpu.dynamic_rotate %0 by %c18_i32 dim 1 : vector<8x384xf32>, i32 -> vector<8x384xf32>
    %c19_i32 = arith.constant 19 : i32
    %8 = tpu.dynamic_rotate %0 by %c19_i32 dim 1 : vector<8x384xf32>, i32 -> vector<8x384xf32>
    %9 = arith.minimumf %2, %3 : vector<8x384xf32>
    %10 = arith.maximumf %2, %3 : vector<8x384xf32>
    %11 = arith.minimumf %0, %5 : vector<8x384xf32>
    %12 = arith.maximumf %0, %5 : vector<8x384xf32>
    %13 = arith.minimumf %7, %8 : vector<8x384xf32>
    %14 = arith.maximumf %7, %8 : vector<8x384xf32>
    %15 = arith.minimumf %1, %9 : vector<8x384xf32>
    %16 = arith.maximumf %1, %9 : vector<8x384xf32>
    %17 = arith.minimumf %4, %11 : vector<8x384xf32>
    %18 = arith.maximumf %4, %11 : vector<8x384xf32>
    %19 = arith.minimumf %6, %13 : vector<8x384xf32>
    %20 = arith.maximumf %6, %13 : vector<8x384xf32>
    %21 = arith.minimumf %16, %10 : vector<8x384xf32>
    %22 = arith.maximumf %16, %10 : vector<8x384xf32>
    %23 = arith.minimumf %18, %12 : vector<8x384xf32>
    %24 = arith.maximumf %18, %12 : vector<8x384xf32>
    %25 = arith.minimumf %20, %14 : vector<8x384xf32>
    %26 = arith.maximumf %20, %14 : vector<8x384xf32>
    %27 = arith.maximumf %15, %17 : vector<8x384xf32>
    %28 = arith.minimumf %24, %26 : vector<8x384xf32>
    %29 = arith.minimumf %23, %25 : vector<8x384xf32>
    %30 = arith.maximumf %23, %25 : vector<8x384xf32>
    %31 = arith.maximumf %27, %19 : vector<8x384xf32>
    %32 = arith.maximumf %21, %29 : vector<8x384xf32>
    %33 = arith.minimumf %22, %28 : vector<8x384xf32>
    %34 = arith.minimumf %32, %30 : vector<8x384xf32>
    %35 = arith.minimumf %34, %33 : vector<8x384xf32>
    %36 = arith.maximumf %34, %33 : vector<8x384xf32>
    %37 = arith.maximumf %31, %35 : vector<8x384xf32>
    %38 = arith.minimumf %37, %36 : vector<8x384xf32>
    %c0_1 = arith.constant 0 : index
    %c0_2 = arith.constant 0 : index
    %39 = vector.load %arg5[%c0_1, %c0_2] : memref<1x30xf32, #tpu.memory_space<vmem>>, vector<1x30xf32>
    %40 = vector.extract_strided_slice %38 {offsets = [0, 0], sizes = [2, 384], strides = [1, 1]} : vector<8x384xf32> to vector<2x384xf32>
    %41 = arith.truncf %40 : vector<2x384xf32> to vector<2x384xbf16>
    %c0_3 = arith.constant 0 : index
    %c0_4 = arith.constant 0 : index
    %42 = vector.load %arg3[%c0_3, %c0_4] : memref<1536x10xbf16, #tpu.memory_space<vmem>>, vector<384x10xbf16>
    %cst = arith.constant dense<0.000000e+00> : vector<2x10xf32>
    %43 = tpu.matmul %41, %42, %cst {dimension_numbers = #tpu.dot_dimension_numbers<[1], [0], [0], [1], [0, 0, 1, 1], [], []>} : vector<2x384xbf16>, vector<384x10xbf16>, vector<2x10xf32> -> vector<2x10xf32>
    %44 = vector.extract_strided_slice %38 {offsets = [2, 0], sizes = [2, 384], strides = [1, 1]} : vector<8x384xf32> to vector<2x384xf32>
    %45 = arith.truncf %44 : vector<2x384xf32> to vector<2x384xbf16>
    %c384 = arith.constant 384 : index
    %c0_5 = arith.constant 0 : index
    %46 = vector.load %arg3[%c384, %c0_5] : memref<1536x10xbf16, #tpu.memory_space<vmem>>, vector<384x10xbf16>
    %cst_6 = arith.constant dense<0.000000e+00> : vector<2x10xf32>
    %47 = tpu.matmul %45, %46, %cst_6 {dimension_numbers = #tpu.dot_dimension_numbers<[1], [0], [0], [1], [0, 0, 1, 1], [], []>} : vector<2x384xbf16>, vector<384x10xbf16>, vector<2x10xf32> -> vector<2x10xf32>
    %48 = arith.addf %43, %47 : vector<2x10xf32>
    %49 = vector.extract_strided_slice %38 {offsets = [4, 0], sizes = [2, 384], strides = [1, 1]} : vector<8x384xf32> to vector<2x384xf32>
    %50 = arith.truncf %49 : vector<2x384xf32> to vector<2x384xbf16>
    %c768 = arith.constant 768 : index
    %c0_7 = arith.constant 0 : index
    %51 = vector.load %arg3[%c768, %c0_7] : memref<1536x10xbf16, #tpu.memory_space<vmem>>, vector<384x10xbf16>
    %cst_8 = arith.constant dense<0.000000e+00> : vector<2x10xf32>
    %52 = tpu.matmul %50, %51, %cst_8 {dimension_numbers = #tpu.dot_dimension_numbers<[1], [0], [0], [1], [0, 0, 1, 1], [], []>} : vector<2x384xbf16>, vector<384x10xbf16>, vector<2x10xf32> -> vector<2x10xf32>
    %53 = arith.addf %48, %52 : vector<2x10xf32>
    %54 = vector.extract_strided_slice %38 {offsets = [6, 0], sizes = [2, 384], strides = [1, 1]} : vector<8x384xf32> to vector<2x384xf32>
    %55 = arith.truncf %54 : vector<2x384xf32> to vector<2x384xbf16>
    %c1152 = arith.constant 1152 : index
    %c0_9 = arith.constant 0 : index
    %56 = vector.load %arg3[%c1152, %c0_9] : memref<1536x10xbf16, #tpu.memory_space<vmem>>, vector<384x10xbf16>
    %cst_10 = arith.constant dense<0.000000e+00> : vector<2x10xf32>
    %57 = tpu.matmul %55, %56, %cst_10 {dimension_numbers = #tpu.dot_dimension_numbers<[1], [0], [0], [1], [0, 0, 1, 1], [], []>} : vector<2x384xbf16>, vector<384x10xbf16>, vector<2x10xf32> -> vector<2x10xf32>
    %58 = arith.addf %53, %57 : vector<2x10xf32>
    %59 = vector.extract_strided_slice %39 {offsets = [0, 0], sizes = [1, 10], strides = [1, 1]} : vector<1x30xf32> to vector<1x10xf32>
    %60 = vector.broadcast %59 : vector<1x10xf32> to vector<2x10xf32>
    %61 = arith.addf %58, %60 : vector<2x10xf32>
    %c0_11 = arith.constant 0 : index
    %c0_12 = arith.constant 0 : index
    %62 = vector.load %arg2[%c0_11, %c0_12] : memref<2x1024xf32, #tpu.memory_space<vmem>>, vector<2x1024xf32>
    %63 = arith.truncf %62 : vector<2x1024xf32> to vector<2x1024xbf16>
    %c0_13 = arith.constant 0 : index
    %c0_14 = arith.constant 0 : index
    %64 = vector.load %arg4[%c0_13, %c0_14] : memref<1024x20xbf16, #tpu.memory_space<vmem>>, vector<1024x20xbf16>
    %cst_15 = arith.constant dense<0.000000e+00> : vector<2x20xf32>
    %65 = tpu.matmul %63, %64, %cst_15 {dimension_numbers = #tpu.dot_dimension_numbers<[1], [0], [0], [1], [0, 0, 1, 1], [], []>} : vector<2x1024xbf16>, vector<1024x20xbf16>, vector<2x20xf32> -> vector<2x20xf32>
    %66 = vector.extract_strided_slice %65 {offsets = [0, 0], sizes = [2, 10], strides = [1, 1]} : vector<2x20xf32> to vector<2x10xf32>
    %67 = vector.extract_strided_slice %39 {offsets = [0, 10], sizes = [1, 10], strides = [1, 1]} : vector<1x30xf32> to vector<1x10xf32>
    %68 = vector.broadcast %67 : vector<1x10xf32> to vector<2x10xf32>
    %69 = arith.addf %66, %68 : vector<2x10xf32>
    %70 = vector.extract_strided_slice %65 {offsets = [0, 10], sizes = [2, 10], strides = [1, 1]} : vector<2x20xf32> to vector<2x10xf32>
    %71 = vector.extract_strided_slice %39 {offsets = [0, 20], sizes = [1, 10], strides = [1, 1]} : vector<1x30xf32> to vector<1x10xf32>
    %72 = vector.broadcast %71 : vector<1x10xf32> to vector<2x10xf32>
    %73 = arith.addf %70, %72 : vector<2x10xf32>
    %cst_16 = arith.constant dense<0xFF800000> : vector<2xf32>
    %74 = vector.multi_reduction <maximumf>, %61, %cst_16 [1] : vector<2x10xf32> to vector<2xf32>
    %75 = vector.shape_cast %74 : vector<2xf32> to vector<2x1xf32>
    %76 = vector.broadcast %75 : vector<2x1xf32> to vector<2x10xf32>
    %77 = arith.subf %61, %76 : vector<2x10xf32>
    %78 = math.exp %77 : vector<2x10xf32>
    %cst_17 = arith.constant dense<0.000000e+00> : vector<2xf32>
    %79 = vector.multi_reduction <add>, %78, %cst_17 [1] : vector<2x10xf32> to vector<2xf32>
    %80 = vector.shape_cast %79 : vector<2xf32> to vector<2x1xf32>
    %81 = vector.broadcast %80 : vector<2x1xf32> to vector<2x10xf32>
    %82 = arith.divf %78, %81 : vector<2x10xf32>
    %cst_18 = arith.constant 5.000000e-01 : f32
    %83 = vector.broadcast %cst_18 : f32 to vector<2x10xf32>
    %84 = arith.mulf %83, %82 : vector<2x10xf32>
    %cst_19 = arith.constant dense<0xFF800000> : vector<2xf32>
    %85 = vector.multi_reduction <maximumf>, %69, %cst_19 [1] : vector<2x10xf32> to vector<2xf32>
    %86 = vector.shape_cast %85 : vector<2xf32> to vector<2x1xf32>
    %87 = vector.broadcast %86 : vector<2x1xf32> to vector<2x10xf32>
    %88 = arith.subf %69, %87 : vector<2x10xf32>
    %89 = math.exp %88 : vector<2x10xf32>
    %cst_20 = arith.constant dense<0.000000e+00> : vector<2xf32>
    %90 = vector.multi_reduction <add>, %89, %cst_20 [1] : vector<2x10xf32> to vector<2xf32>
    %91 = vector.shape_cast %90 : vector<2xf32> to vector<2x1xf32>
    %92 = vector.broadcast %91 : vector<2x1xf32> to vector<2x10xf32>
    %93 = arith.divf %89, %92 : vector<2x10xf32>
    %cst_21 = arith.constant 3.000000e-01 : f32
    %94 = vector.broadcast %cst_21 : f32 to vector<2x10xf32>
    %95 = arith.mulf %94, %93 : vector<2x10xf32>
    %96 = arith.addf %84, %95 : vector<2x10xf32>
    %cst_22 = arith.constant dense<0xFF800000> : vector<2xf32>
    %97 = vector.multi_reduction <maximumf>, %73, %cst_22 [1] : vector<2x10xf32> to vector<2xf32>
    %98 = vector.shape_cast %97 : vector<2xf32> to vector<2x1xf32>
    %99 = vector.broadcast %98 : vector<2x1xf32> to vector<2x10xf32>
    %100 = arith.subf %73, %99 : vector<2x10xf32>
    %101 = math.exp %100 : vector<2x10xf32>
    %cst_23 = arith.constant dense<0.000000e+00> : vector<2xf32>
    %102 = vector.multi_reduction <add>, %101, %cst_23 [1] : vector<2x10xf32> to vector<2xf32>
    %103 = vector.shape_cast %102 : vector<2xf32> to vector<2x1xf32>
    %104 = vector.broadcast %103 : vector<2x1xf32> to vector<2x10xf32>
    %105 = arith.divf %101, %104 : vector<2x10xf32>
    %cst_24 = arith.constant 2.000000e-01 : f32
    %106 = vector.broadcast %cst_24 : f32 to vector<2x10xf32>
    %107 = arith.mulf %106, %105 : vector<2x10xf32>
    %108 = arith.addf %96, %107 : vector<2x10xf32>
    %c0_25 = arith.constant 0 : index
    %c0_26 = arith.constant 0 : index
    %109 = vector.load %arg6[%c0_25, %c0_26] : memref<2x10xf32, #tpu.memory_space<vmem>>, vector<2x10xf32>
    tpu.vector_store %arg6[%c0_25, %c0_26], %108 {strides = array<i32>} : memref<2x10xf32, #tpu.memory_space<vmem>>, vector<2x10xf32>,
    return
  }
  func.func @transform_0(%arg0: i32) -> (i32, i32) {
    %c0_i32 = arith.constant 0 : i32
    %c0_i32_0 = arith.constant 0 : i32
    %c0_i32_1 = arith.constant 0 : i32
    return %c0_i32, %c0_i32_0 : i32, i32
  }
  func.func @transform_1(%arg0: i32) -> (i32, i32) {
    %c0_i32 = arith.constant 0 : i32
    %c0_i32_0 = arith.constant 0 : i32
    %c0_i32_1 = arith.constant 0 : i32
    return %c0_i32, %c0_i32_0 : i32, i32
  }
  func.func @transform_2(%arg0: i32) -> (i32, i32) {
    %c0_i32 = arith.constant 0 : i32
    %c0_i32_0 = arith.constant 0 : i32
    %c0_i32_1 = arith.constant 0 : i32
    return %c0_i32, %c0_i32_0 : i32, i32
  }
  func.func @transform_3(%arg0: i32) -> (i32, i32) {
    %c0_i32 = arith.constant 0 : i32
    %c0_i32_0 = arith.constant 0 : i32
    %c0_i32_1 = arith.constant 0 : i32
    return %c0_i32, %c0_i32_0 : i32, i32
  }
  func.func @transform_4(%arg0: i32) -> (i32, i32) {
    %c0_i32 = arith.constant 0 : i32
    %c0_i32_0 = arith.constant 0 : i32
    %c0_i32_1 = arith.constant 0 : i32
    return %c0_i32, %c0_i32_0 : i32, i32
  }
  func.func @transform_5(%arg0: i32) -> (i32, i32) {
    %c0_i32 = arith.constant 0 : i32
    %c0_i32_0 = arith.constant 0 : i32
    %c0_i32_1 = arith.constant 0 : i32
    return %c0_i32, %c0_i32_0 : i32, i32
  }
}

</mosaic_0001>

<llo_original>
// kernel: ensemble_forward.1
$region0: #{ensemble_forward.1}
  #allocation0 [shape = 'u32[]', space=smem, size = 0x4, offset = 0x4, fixed_abs, tag = 'smem constant byte address 0x4 - core index']
  #allocation1 [shape = 'u32[144,128]{1,0:T(1,128)}', space=vmem, size = 0x12000, scoped, tag = 'internal scratch']
  %s0 = inlined_call_operand.vmem [shape: f32[8,384], index: 0, kind: input, shape index: {}]
  %s1 = inlined_call_operand.vmem [shape: f32[2,1024], index: 1, kind: input, shape index: {}]
  %s2 = inlined_call_operand.vmem [shape: bf16[1536,10], index: 2, kind: input, shape index: {}]
  %s3 = inlined_call_operand.vmem [shape: bf16[1024,20], index: 3, kind: input, shape index: {}]
  %s4 = inlined_call_operand.vmem [shape: f32[1,30], index: 4, kind: input, shape index: {}]
  %s5 = inlined_call_operand.hbm [shape: f32[2,10], index: 5, kind: output, shape index: {}]
  %s6 = sld [smem:[#allocation0]]
  $region30: #{ensemble_forward.1} parent=0
    _
  %s8 = ssub.s32 1, %s6
  %s9 = scalar_select 0, %s8, %s6
  $region1: #{ensemble_forward.1} parent=0
    #allocation2 [shape = 'u8[1024]{0}', space=vmem, size = 0x400, scoped, tag = 'output window, operand 0, single buffered']
    #allocation3 [shape = 's32[1]{0}', space=sflag, size = 0x4, scoped, tag = 'scoped memory for ensemble_forward.1']
    %10 = vsyncpa [#allocation3], 0
    // Predicated region
    $region2: #{ensemble_forward.1} parent=1 // pred_check
      _
    $region3: #{ensemble_forward.1} parent=1 // pred_check_branch
      %12 = sbr.rel (0) target = $region5
    $region4: #{ensemble_forward.1} parent=1 // pred_region
      _
    $region5: #{ensemble_forward.1} parent=1 // pred_fallthru
      _
    // Predicated region
    $region6: #{ensemble_forward.1} parent=1 // pred_check
      _
    $region7: #{ensemble_forward.1} parent=1 // pred_check_branch
      %14 = sbr.rel (0) target = $region9
    $region8: #{ensemble_forward.1} parent=1 // pred_region
      _
    $region9: #{ensemble_forward.1} parent=1 // pred_fallthru
      _
    // Predicated region
    $region10: #{ensemble_forward.1} parent=1 // pred_check
      _
    $region11: #{ensemble_forward.1} parent=1 // pred_check_branch
      %16 = sbr.rel (0) target = $region13
    $region12: #{ensemble_forward.1} parent=1 // pred_region
      _
    $region13: #{ensemble_forward.1} parent=1 // pred_fallthru
      _
    // Predicated region
    $region14: #{ensemble_forward.1} parent=1 // pred_check
      _
    $region15: #{ensemble_forward.1} parent=1 // pred_check_branch
      %18 = sbr.rel (0) target = $region17
    $region16: #{ensemble_forward.1} parent=1 // pred_region
      _
    $region17: #{ensemble_forward.1} parent=1 // pred_fallthru
      _
    // Predicated region
    $region18: #{ensemble_forward.1} parent=1 // pred_check
      _
    $region19: #{ensemble_forward.1} parent=1 // pred_check_branch
      %20 = sbr.rel (0) target = $region21
    $region20: #{ensemble_forward.1} parent=1 // pred_region
      _
    $region21: #{ensemble_forward.1} parent=1 // pred_fallthru
      _
    %v22 = vld [vmem:[%s0] sm:$0xff]
    %v23 = vld [vmem:[%s0 + $0x8] sm:$0xff]
    %v24 = vld [vmem:[%s0 + $0x10] sm:$0xff]
    %25 = vrot.lane.b32.xlu0 %v22, 109
    %v26 = vpop.permute.xlu0 %25
    %27 = vrot.lane.b32.xlu0 %v23, 109
    %v28 = vpop.permute.xlu0 %27
    %29 = vrot.lane.b32.xlu0 %v24, 109
    %v30 = vpop.permute.xlu0 %29
    %v31 = vlaneseq
    %v32 = vand.u32 %v31, 127
    %vm33 = vcmp.lt.s32.totalorder %v32, 109
    %v34 = vsel %vm33, %v28, %v30
    %v35 = vsel %vm33, %v26, %v28
    %v36 = vsel %vm33, %v30, %v26
    %37 = vrot.lane.b32.xlu0 %v22, 110
    %v38 = vpop.permute.xlu0 %37
    %39 = vrot.lane.b32.xlu0 %v23, 110
    %v40 = vpop.permute.xlu0 %39
    %41 = vrot.lane.b32.xlu0 %v24, 110
    %v42 = vpop.permute.xlu0 %41
    %vm43 = vcmp.lt.s32.totalorder %v32, 110
    %v44 = vsel %vm43, %v40, %v42
    %v45 = vsel %vm43, %v38, %v40
    %v46 = vsel %vm43, %v42, %v38
    %47 = vrot.lane.b32.xlu0 %v22, 111
    %v48 = vpop.permute.xlu0 %47
    %49 = vrot.lane.b32.xlu0 %v23, 111
    %v50 = vpop.permute.xlu0 %49
    %51 = vrot.lane.b32.xlu0 %v24, 111
    %v52 = vpop.permute.xlu0 %51
    %vm53 = vcmp.lt.s32.totalorder %v32, 111
    %v54 = vsel %vm53, %v50, %v52
    %v55 = vsel %vm53, %v48, %v50
    %v56 = vsel %vm53, %v52, %v48
    %57 = vrot.lane.b32.xlu0 %v22, 127
    %v58 = vpop.permute.xlu0 %57
    %59 = vrot.lane.b32.xlu0 %v23, 127
    %v60 = vpop.permute.xlu0 %59
    %61 = vrot.lane.b32.xlu0 %v24, 127
    %v62 = vpop.permute.xlu0 %61
    %vm63 = vcmp.lt.s32.totalorder %v32, 127
    %v64 = vsel %vm63, %v60, %v62
    %v65 = vsel %vm63, %v58, %v60
    %v66 = vsel %vm63, %v62, %v58
    %67 = vrot.lane.b32.xlu0 %v22, 1
    %v68 = vpop.permute.xlu0 %67
    %69 = vrot.lane.b32.xlu0 %v23, 1
    %v70 = vpop.permute.xlu0 %69
    %71 = vrot.lane.b32.xlu0 %v24, 1
    %v72 = vpop.permute.xlu0 %71
    %vm73 = vcmp.lt.s32.totalorder %v32, 1
    %v74 = vsel %vm73, %v70, %v72
    %v75 = vsel %vm73, %v68, %v70
    %v76 = vsel %vm73, %v72, %v68
    %77 = vrot.lane.b32.xlu0 %v22, 17
    %v78 = vpop.permute.xlu0 %77
    %79 = vrot.lane.b32.xlu0 %v23, 17
    %v80 = vpop.permute.xlu0 %79
    %81 = vrot.lane.b32.xlu0 %v24, 17
    %v82 = vpop.permute.xlu0 %81
    %vm83 = vcmp.lt.s32.totalorder %v32, 17
    %v84 = vsel %vm83, %v80, %v82
    %v85 = vsel %vm83, %v78, %v80
    %v86 = vsel %vm83, %v82, %v78
    %87 = vrot.lane.b32.xlu0 %v22, 18
    %v88 = vpop.permute.xlu0 %87
    %89 = vrot.lane.b32.xlu0 %v23, 18
    %v90 = vpop.permute.xlu0 %89
    %91 = vrot.lane.b32.xlu0 %v24, 18
    %v92 = vpop.permute.xlu0 %91
    %vm93 = vcmp.lt.s32.totalorder %v32, 18
    %v94 = vsel %vm93, %v90, %v92
    %v95 = vsel %vm93, %v88, %v90
    %v96 = vsel %vm93, %v92, %v88
    %97 = vrot.lane.b32.xlu0 %v22, 19
    %v98 = vpop.permute.xlu0 %97
    %99 = vrot.lane.b32.xlu0 %v23, 19
    %v100 = vpop.permute.xlu0 %99
    %101 = vrot.lane.b32.xlu0 %v24, 19
    %v102 = vpop.permute.xlu0 %101
    %vm103 = vcmp.lt.s32.totalorder %v32, 19
    %v104 = vsel %vm103, %v100, %v102
    %v105 = vsel %vm103, %v98, %v100
    %v106 = vsel %vm103, %v102, %v98
    %v107 = vmin.f32 %v45, %v55
    %v108 = vmin.f32 %v44, %v54
    %v109 = vmin.f32 %v46, %v56
    %v110 = vmax.f32 %v45, %v55
    %v111 = vmax.f32 %v44, %v54
    %v112 = vmax.f32 %v46, %v56
    %v113 = vmin.f32 %v22, %v76
    %v114 = vmin.f32 %v23, %v75
    %v115 = vmin.f32 %v24, %v74
    %v116 = vmax.f32 %v22, %v76
    %v117 = vmax.f32 %v23, %v75
    %v118 = vmax.f32 %v24, %v74
    %v119 = vmin.f32 %v96, %v106
    %v120 = vmin.f32 %v95, %v105
    %v121 = vmin.f32 %v94, %v104
    %v122 = vmax.f32 %v96, %v106
    %v123 = vmax.f32 %v95, %v105
    %v124 = vmax.f32 %v94, %v104
    %v125 = vmin.f32 %v35, %v107
    %v126 = vmin.f32 %v34, %v108
    %v127 = vmin.f32 %v36, %v109
    %v128 = vmax.f32 %v35, %v107
    %v129 = vmax.f32 %v34, %v108
    %v130 = vmax.f32 %v36, %v109
    %v131 = vmin.f32 %v65, %v113
    %v132 = vmin.f32 %v64, %v114
    %v133 = vmin.f32 %v66, %v115
    %v134 = vmax.f32 %v65, %v113
    %v135 = vmax.f32 %v64, %v114
    %v136 = vmax.f32 %v66, %v115
    %v137 = vmin.f32 %v86, %v119
    %v138 = vmin.f32 %v85, %v120
    %v139 = vmin.f32 %v84, %v121
    %v140 = vmax.f32 %v86, %v119
    %v141 = vmax.f32 %v85, %v120
    %v142 = vmax.f32 %v84, %v121
    %v143 = vmin.f32 %v128, %v110
    %v144 = vmin.f32 %v129, %v111
    %v145 = vmin.f32 %v130, %v112
    %v146 = vmax.f32 %v128, %v110
    %v147 = vmax.f32 %v129, %v111
    %v148 = vmax.f32 %v130, %v112
    %v149 = vmin.f32 %v134, %v116
    %v150 = vmin.f32 %v135, %v117
    %v151 = vmin.f32 %v136, %v118
    %v152 = vmax.f32 %v134, %v116
    %v153 = vmax.f32 %v135, %v117
    %v154 = vmax.f32 %v136, %v118
    %v155 = vmin.f32 %v140, %v122
    %v156 = vmin.f32 %v141, %v123
    %v157 = vmin.f32 %v142, %v124
    %v158 = vmax.f32 %v140, %v122
    %v159 = vmax.f32 %v141, %v123
    %v160 = vmax.f32 %v142, %v124
    %v161 = vmax.f32 %v125, %v131
    %v162 = vmax.f32 %v126, %v132
    %v163 = vmax.f32 %v127, %v133
    %v164 = vmin.f32 %v152, %v158
    %v165 = vmin.f32 %v153, %v159
    %v166 = vmin.f32 %v154, %v160
    %v167 = vmin.f32 %v149, %v155
    %v168 = vmin.f32 %v150, %v156
    %v169 = vmin.f32 %v151, %v157
    %v170 = vmax.f32 %v149, %v155
    %v171 = vmax.f32 %v150, %v156
    %v172 = vmax.f32 %v151, %v157
    %v173 = vmax.f32 %v161, %v137
    %v174 = vmax.f32 %v162, %v138
    %v175 = vmax.f32 %v163, %v139
    %v176 = vmax.f32 %v143, %v167
    %v177 = vmax.f32 %v144, %v168
    %v178 = vmax.f32 %v145, %v169
    %v179 = vmin.f32 %v146, %v164
    %v180 = vmin.f32 %v147, %v165
    %v181 = vmin.f32 %v148, %v166
    %v182 = vmin.f32 %v176, %v170
    %v183 = vmin.f32 %v177, %v171
    %v184 = vmin.f32 %v178, %v172
    %v185 = vmin.f32 %v182, %v179
    %v186 = vmin.f32 %v183, %v180
    %v187 = vmin.f32 %v184, %v181
    %v188 = vmax.f32 %v182, %v179
    %v189 = vmax.f32 %v183, %v180
    %v190 = vmax.f32 %v184, %v181
    %v191 = vmax.f32 %v173, %v185
    %v192 = vmax.f32 %v174, %v186
    %v193 = vmax.f32 %v175, %v187
    %v194 = vmin.f32 %v191, %v188
    %v195 = vmin.f32 %v192, %v189
    %v196 = vmin.f32 %v193, %v190
    %v197 = vld [vmem:[%s4] sm:$0x1]
    %v198 = vpack.c.bf16 %v194, %v194
    %v199 = vpack.c.bf16 %v195, %v195
    %v200 = vpack.c.bf16 %v196, %v196
    %v201 = vld [vmem:[%s2] sm:$0xf]
    %v202 = vld [vmem:[%s2 + $0x4] sm:$0xf]
    %v203 = vld [vmem:[%s2 + $0x8] sm:$0xf]
    %v204 = vld [vmem:[%s2 + $0xc] sm:$0xf]
    %v205 = vld [vmem:[%s2 + $0x10] sm:$0xf]
    %v206 = vld [vmem:[%s2 + $0x14] sm:$0xf]
    %v207 = vld [vmem:[%s2 + $0x18] sm:$0xf]
    %v208 = vld [vmem:[%s2 + $0x1c] sm:$0xf]
    %v209 = vld [vmem:[%s2 + $0x20] sm:$0xf]
    %v210 = vld [vmem:[%s2 + $0x24] sm:$0xf]
    %v211 = vld [vmem:[%s2 + $0x28] sm:$0xf]
    %v212 = vld [vmem:[%s2 + $0x2c] sm:$0xf]
    %v213 = vld [vmem:[%s2 + $0x30] sm:$0xf]
    %v214 = vld [vmem:[%s2 + $0x34] sm:$0xf]
    %v215 = vld [vmem:[%s2 + $0x38] sm:$0xf]
    %v216 = vld [vmem:[%s2 + $0x3c] sm:$0xf]
    %v217 = vld [vmem:[%s2 + $0x40] sm:$0xf]
    %v218 = vld [vmem:[%s2 + $0x44] sm:$0xf]
    %v219 = vld [vmem:[%s2 + $0x48] sm:$0xf]
    %v220 = vld [vmem:[%s2 + $0x4c] sm:$0xf]
    %v221 = vld [vmem:[%s2 + $0x50] sm:$0xf]
    %v222 = vld [vmem:[%s2 + $0x54] sm:$0xf]
    %v223 = vld [vmem:[%s2 + $0x58] sm:$0xf]
    %v224 = vld [vmem:[%s2 + $0x5c] sm:$0xf]
    %v225 = vld [vmem:[%s2 + $0x60] sm:$0xf]
    %v226 = vld [vmem:[%s2 + $0x64] sm:$0xf]
    %v227 = vld [vmem:[%s2 + $0x68] sm:$0xf]
    %v228 = vld [vmem:[%s2 + $0x6c] sm:$0xf]
    %v229 = vld [vmem:[%s2 + $0x70] sm:$0xf]
    %v230 = vld [vmem:[%s2 + $0x74] sm:$0xf]
    %v231 = vld [vmem:[%s2 + $0x78] sm:$0xf]
    %v232 = vld [vmem:[%s2 + $0x7c] sm:$0xf]
    %v233 = vld [vmem:[%s2 + $0x80] sm:$0xf]
    %v234 = vld [vmem:[%s2 + $0x84] sm:$0xf]
    %v235 = vld [vmem:[%s2 + $0x88] sm:$0xf]
    %v236 = vld [vmem:[%s2 + $0x8c] sm:$0xf]
    %v237 = vld [vmem:[%s2 + $0x90] sm:$0xf]
    %v238 = vld [vmem:[%s2 + $0x94] sm:$0xf]
    %v239 = vld [vmem:[%s2 + $0x98] sm:$0xf]
    %v240 = vld [vmem:[%s2 + $0x9c] sm:$0xf]
    %v241 = vld [vmem:[%s2 + $0xa0] sm:$0xf]
    %v242 = vld [vmem:[%s2 + $0xa4] sm:$0xf]
    %v243 = vld [vmem:[%s2 + $0xa8] sm:$0xf]
    %v244 = vld [vmem:[%s2 + $0xac] sm:$0xf]
    %v245 = vld [vmem:[%s2 + $0xb0] sm:$0xf]
    %v246 = vld [vmem:[%s2 + $0xb4] sm:$0xf]
    %v247 = vld [vmem:[%s2 + $0xb8] sm:$0xf]
    %v248 = vld [vmem:[%s2 + $0xbc] sm:$0xf]
    %v249 = vld [vmem:[%s2 + $0xc0] sm:$0xf]
    %v250 = vld [vmem:[%s2 + $0xc4] sm:$0xf]
    %v251 = vld [vmem:[%s2 + $0xc8] sm:$0xf]
    %v252 = vld [vmem:[%s2 + $0xcc] sm:$0xf]
    %v253 = vld [vmem:[%s2 + $0xd0] sm:$0xf]
    %v254 = vld [vmem:[%s2 + $0xd4] sm:$0xf]
    %v255 = vld [vmem:[%s2 + $0xd8] sm:$0xf]
    %v256 = vld [vmem:[%s2 + $0xdc] sm:$0xf]
    %v257 = vld [vmem:[%s2 + $0xe0] sm:$0xf]
    %v258 = vld [vmem:[%s2 + $0xe4] sm:$0xf]
    %v259 = vld [vmem:[%s2 + $0xe8] sm:$0xf]
    %v260 = vld [vmem:[%s2 + $0xec] sm:$0xf]
    %v261 = vld [vmem:[%s2 + $0xf0] sm:$0xf]
    %v262 = vld [vmem:[%s2 + $0xf4] sm:$0xf]
    %v263 = vld [vmem:[%s2 + $0xf8] sm:$0xf]
    %v264 = vld [vmem:[%s2 + $0xfc] sm:$0xf]
    %v265 = vld [vmem:[%s2 + $0x100] sm:$0xf]
    %v266 = vld [vmem:[%s2 + $0x104] sm:$0xf]
    %v267 = vld [vmem:[%s2 + $0x108] sm:$0xf]
    %v268 = vld [vmem:[%s2 + $0x10c] sm:$0xf]
    %v269 = vld [vmem:[%s2 + $0x110] sm:$0xf]
    %v270 = vld [vmem:[%s2 + $0x114] sm:$0xf]
    %v271 = vld [vmem:[%s2 + $0x118] sm:$0xf]
    %v272 = vld [vmem:[%s2 + $0x11c] sm:$0xf]
    %v273 = vld [vmem:[%s2 + $0x120] sm:$0xf]
    %v274 = vld [vmem:[%s2 + $0x124] sm:$0xf]
    %v275 = vld [vmem:[%s2 + $0x128] sm:$0xf]
    %v276 = vld [vmem:[%s2 + $0x12c] sm:$0xf]
    %v277 = vld [vmem:[%s2 + $0x130] sm:$0xf]
    %v278 = vld [vmem:[%s2 + $0x134] sm:$0xf]
    %v279 = vld [vmem:[%s2 + $0x138] sm:$0xf]
    %v280 = vld [vmem:[%s2 + $0x13c] sm:$0xf]
    %v281 = vld [vmem:[%s2 + $0x140] sm:$0xf]
    %v282 = vld [vmem:[%s2 + $0x144] sm:$0xf]
    %v283 = vld [vmem:[%s2 + $0x148] sm:$0xf]
    %v284 = vld [vmem:[%s2 + $0x14c] sm:$0xf]
    %v285 = vld [vmem:[%s2 + $0x150] sm:$0xf]
    %v286 = vld [vmem:[%s2 + $0x154] sm:$0xf]
    %v287 = vld [vmem:[%s2 + $0x158] sm:$0xf]
    %v288 = vld [vmem:[%s2 + $0x15c] sm:$0xf]
    %v289 = vld [vmem:[%s2 + $0x160] sm:$0xf]
    %v290 = vld [vmem:[%s2 + $0x164] sm:$0xf]
    %v291 = vld [vmem:[%s2 + $0x168] sm:$0xf]
    %v292 = vld [vmem:[%s2 + $0x16c] sm:$0xf]
    %v293 = vld [vmem:[%s2 + $0x170] sm:$0xf]
    %v294 = vld [vmem:[%s2 + $0x174] sm:$0xf]
    %v295 = vld [vmem:[%s2 + $0x178] sm:$0xf]
    %v296 = vld [vmem:[%s2 + $0x17c] sm:$0xf]
    %v300 = vrot.slane %v198, 1
    %v301 = vrot.slane %v199, 1
    %v302 = vrot.slane %v200, 1
    %v354 = vunpack.c.l.b16 %v249
    %v355 = vunpack.c.l.b16 %v250
    %v356 = vunpack.c.l.b16 %v251
    %v357 = vunpack.c.l.b16 %v252
    %v358 = vunpack.c.l.b16 %v253
    %v359 = vunpack.c.l.b16 %v254
    %v360 = vunpack.c.l.b16 %v255
    %v361 = vunpack.c.l.b16 %v256
    %v362 = vunpack.c.l.b16 %v257
    %v363 = vunpack.c.l.b16 %v258
    %v364 = vunpack.c.l.b16 %v259
    %v365 = vunpack.c.l.b16 %v260
    %v366 = vunpack.c.l.b16 %v261
    %v367 = vunpack.c.l.b16 %v262
    %v368 = vunpack.c.l.b16 %v263
    %v369 = vunpack.c.l.b16 %v264
    %v370 = vunpack.c.l.b16 %v265
    %v371 = vunpack.c.l.b16 %v266
    %v372 = vunpack.c.l.b16 %v267
    %v373 = vunpack.c.l.b16 %v268
    %v374 = vunpack.c.l.b16 %v269
    %v375 = vunpack.c.l.b16 %v270
    %v376 = vunpack.c.l.b16 %v271
    %v377 = vunpack.c.l.b16 %v272
    %v378 = vunpack.c.l.b16 %v273
    %v379 = vunpack.c.l.b16 %v274
    %v380 = vunpack.c.l.b16 %v275
    %v381 = vunpack.c.l.b16 %v276
    %v382 = vunpack.c.l.b16 %v277
    %v383 = vunpack.c.l.b16 %v278
    %v384 = vunpack.c.l.b16 %v279
    %v385 = vunpack.c.l.b16 %v280
    %v386 = vunpack.c.l.b16 %v281
    %v387 = vunpack.c.l.b16 %v282
    %v388 = vunpack.c.l.b16 %v283
    %v389 = vunpack.c.l.b16 %v284
    %v390 = vunpack.c.l.b16 %v285
    %v391 = vunpack.c.l.b16 %v286
    %v392 = vunpack.c.l.b16 %v287
    %v393 = vunpack.c.l.b16 %v288
    %v394 = vunpack.c.l.b16 %v289
    %v395 = vunpack.c.l.b16 %v290
    %v396 = vunpack.c.l.b16 %v291
    %v397 = vunpack.c.l.b16 %v292
    %v398 = vunpack.c.l.b16 %v293
    %v399 = vunpack.c.l.b16 %v294
    %v400 = vunpack.c.l.b16 %v295
    %v401 = vunpack.c.l.b16 %v296
    %v402 = vpack.c.b16 %v355, %v354
    %v403 = vpack.c.b16 %v357, %v356
    %v404 = vpack.c.b16 %v359, %v358
    %v405 = vpack.c.b16 %v361, %v360
    %v406 = vpack.c.b16 %v363, %v362
    %v407 = vpack.c.b16 %v365, %v364
    %v408 = vpack.c.b16 %v367, %v366
    %v409 = vpack.c.b16 %v369, %v368
    %v410 = vpack.c.b16 %v371, %v370
    %v411 = vpack.c.b16 %v373, %v372
    %v412 = vpack.c.b16 %v375, %v374
    %v413 = vpack.c.b16 %v377, %v376
    %v414 = vpack.c.b16 %v379, %v378
    %v415 = vpack.c.b16 %v381, %v380
    %v416 = vpack.c.b16 %v383, %v382
    %v417 = vpack.c.b16 %v385, %v384
    %v418 = vpack.c.b16 %v387, %v386
    %v419 = vpack.c.b16 %v389, %v388
    %v420 = vpack.c.b16 %v391, %v390
    %v421 = vpack.c.b16 %v393, %v392
    %v422 = vpack.c.b16 %v395, %v394
    %v423 = vpack.c.b16 %v397, %v396
    %v424 = vpack.c.b16 %v399, %v398
    %v425 = vpack.c.b16 %v401, %v400
    %450 = vmatprep.subr.bf16.mxu0 0
    %451 = vmatpush1.bf16.msra.mxu0 %v402
    %452 = vmatprep.subr.bf16.mxu0 0
    %453 = vmatpush1.bf16.msra.mxu0 %v403
    %454 = vmatprep.subr.bf16.mxu0 0
    %455 = vmatpush1.bf16.msra.mxu0 %v404
    %456 = vmatprep.subr.bf16.mxu0 0
    %457 = vmatpush1.bf16.msra.mxu0 %v405
    %458 = vmatprep.subr.bf16.mxu0 0
    %459 = vmatpush1.bf16.msra.mxu0 %v406
    %460 = vmatprep.subr.bf16.mxu0 0
    %461 = vmatpush1.bf16.msra.mxu0 %v407
    %462 = vmatprep.subr.bf16.mxu0 0
    %463 = vmatpush1.bf16.msra.mxu0 %v408
    %464 = vmatprep.subr.bf16.mxu0 0
    %465 = vmatpush1.bf16.msra.mxu0 %v409
    %466 = vmatprep.subr.bf16.mxu0 0
    %467 = vmatpush1.bf16.msra.mxu0 %v410
    %468 = vmatprep.subr.bf16.mxu0 0
    %469 = vmatpush1.bf16.msra.mxu0 %v411
    %470 = vmatprep.subr.bf16.mxu0 0
    %471 = vmatpush1.bf16.msra.mxu0 %v412
    %472 = vmatprep.subr.bf16.mxu0 0
    %473 = vmatpush1.bf16.msra.mxu0 %v413
    %474 = vmatprep.subr.bf16.mxu0 0
    %475 = vmatpush1.bf16.msra.mxu0 %v414
    %476 = vmatprep.subr.bf16.mxu0 0
    %477 = vmatpush1.bf16.msra.mxu0 %v415
    %478 = vmatprep.subr.bf16.mxu0 0
    %479 = vmatpush1.bf16.msra.mxu0 %v416
    %480 = vmatprep.subr.bf16.mxu0 0
    %481 = vmatpush1.bf16.msra.mxu0 %v417
    %482 = vmatprep.mubr.bf16.mxu0 %v301
    %483 = vmatmul.mubr.bf16.gmra.mrb[0].mxu0 %v300
    %v484 = vpop.f32.mrb[0].mxu0
    %v485 = vadd.f32 0.0, %v484
    %v486 = vpop.f32.mrb[0].mxu0
    %v487 = vpop.f32.mrb[0].mxu0
    %v488 = vpop.f32.mrb[0].mxu0
    %489 = vdwg.mxu0
    %490 = vmatprep.subr.bf16.mxu0 0
    %491 = vmatpush1.bf16.msra.mxu0 %v418
    %492 = vmatprep.subr.bf16.mxu0 0
    %493 = vmatpush1.bf16.msra.mxu0 %v419
    %494 = vmatprep.subr.bf16.mxu0 0
    %495 = vmatpush1.bf16.msra.mxu0 %v420
    %496 = vmatprep.subr.bf16.mxu0 0
    %497 = vmatpush1.bf16.msra.mxu0 %v421
    %498 = vmatprep.subr.bf16.mxu0 0
    %499 = vmatpush1.bf16.msra.mxu0 %v422
    %500 = vmatprep.subr.bf16.mxu0 0
    %501 = vmatpush1.bf16.msra.mxu0 %v423
    %502 = vmatprep.subr.bf16.mxu0 0
    %503 = vmatpush1.bf16.msra.mxu0 %v424
    %504 = vmatprep.subr.bf16.mxu0 0
    %505 = vmatpush1.bf16.msra.mxu0 %v425
    %506 = vmatprep.subr.bf16.mxu0 0
    %507 = vmatpush1.bf16.msra.mxu0 0
    %508 = vmatprep.subr.bf16.mxu0 0
    %509 = vmatpush1.bf16.msra.mxu0 0
    %510 = vmatprep.subr.bf16.mxu0 0
    %511 = vmatpush1.bf16.msra.mxu0 0
    %512 = vmatprep.subr.bf16.mxu0 0
    %513 = vmatpush1.bf16.msra.mxu0 0
    %514 = vmatprep.subr.bf16.mxu0 0
    %515 = vmatpush1.bf16.msra.mxu0 0
    %516 = vmatprep.subr.bf16.mxu0 0
    %517 = vmatpush1.bf16.msra.mxu0 0
    %518 = vmatprep.subr.bf16.mxu0 0
    %519 = vmatpush1.bf16.msra.mxu0 0
    %520 = vmatprep.subr.bf16.mxu0 0
    %521 = vmatpush1.bf16.msra.mxu0 0
    %522 = vmatprep.mubr.bf16.mxu0 0
    %523 = vmatmul.mubr.bf16.gmra.mrb[0].mxu0 %v302
    %v524 = vpop.f32.mrb[0].mxu0
    %v525 = vadd.f32 %v485, %v524
    %v526 = vpop.f32.mrb[0].mxu0
    %v527 = vpop.f32.mrb[0].mxu0
    %v528 = vpop.f32.mrb[0].mxu0
    %529 = vdwg.mxu0
    %v578 = vunpack.c.l.b16 %v201
    %v579 = vunpack.c.l.b16 %v202
    %v580 = vunpack.c.l.b16 %v203
    %v581 = vunpack.c.l.b16 %v204
    %v582 = vunpack.c.l.b16 %v205
    %v583 = vunpack.c.l.b16 %v206
    %v584 = vunpack.c.l.b16 %v207
    %v585 = vunpack.c.l.b16 %v208
    %v586 = vunpack.c.l.b16 %v209
    %v587 = vunpack.c.l.b16 %v210
    %v588 = vunpack.c.l.b16 %v211
    %v589 = vunpack.c.l.b16 %v212
    %v590 = vunpack.c.l.b16 %v213
    %v591 = vunpack.c.l.b16 %v214
    %v592 = vunpack.c.l.b16 %v215
    %v593 = vunpack.c.l.b16 %v216
    %v594 = vunpack.c.l.b16 %v217
    %v595 = vunpack.c.l.b16 %v218
    %v596 = vunpack.c.l.b16 %v219
    %v597 = vunpack.c.l.b16 %v220
    %v598 = vunpack.c.l.b16 %v221
    %v599 = vunpack.c.l.b16 %v222
    %v600 = vunpack.c.l.b16 %v223
    %v601 = vunpack.c.l.b16 %v224
    %v602 = vunpack.c.l.b16 %v225
    %v603 = vunpack.c.l.b16 %v226
    %v604 = vunpack.c.l.b16 %v227
    %v605 = vunpack.c.l.b16 %v228
    %v606 = vunpack.c.l.b16 %v229
    %v607 = vunpack.c.l.b16 %v230
    %v608 = vunpack.c.l.b16 %v231
    %v609 = vunpack.c.l.b16 %v232
    %v610 = vunpack.c.l.b16 %v233
    %v611 = vunpack.c.l.b16 %v234
    %v612 = vunpack.c.l.b16 %v235
    %v613 = vunpack.c.l.b16 %v236
    %v614 = vunpack.c.l.b16 %v237
    %v615 = vunpack.c.l.b16 %v238
    %v616 = vunpack.c.l.b16 %v239
    %v617 = vunpack.c.l.b16 %v240
    %v618 = vunpack.c.l.b16 %v241
    %v619 = vunpack.c.l.b16 %v242
    %v620 = vunpack.c.l.b16 %v243
    %v621 = vunpack.c.l.b16 %v244
    %v622 = vunpack.c.l.b16 %v245
    %v623 = vunpack.c.l.b16 %v246
    %v624 = vunpack.c.l.b16 %v247
    %v625 = vunpack.c.l.b16 %v248
    %v626 = vpack.c.b16 %v579, %v578
    %v627 = vpack.c.b16 %v581, %v580
    %v628 = vpack.c.b16 %v583, %v582
    %v629 = vpack.c.b16 %v585, %v584
    %v630 = vpack.c.b16 %v587, %v586
    %v631 = vpack.c.b16 %v589, %v588
    %v632 = vpack.c.b16 %v591, %v590
    %v633 = vpack.c.b16 %v593, %v592
    %v634 = vpack.c.b16 %v595, %v594
    %v635 = vpack.c.b16 %v597, %v596
    %v636 = vpack.c.b16 %v599, %v598
    %v637 = vpack.c.b16 %v601, %v600
    %v638 = vpack.c.b16 %v603, %v602
    %v639 = vpack.c.b16 %v605, %v604
    %v640 = vpack.c.b16 %v607, %v606
    %v641 = vpack.c.b16 %v609, %v608
    %v642 = vpack.c.b16 %v611, %v610
    %v643 = vpack.c.b16 %v613, %v612
    %v644 = vpack.c.b16 %v615, %v614
    %v645 = vpack.c.b16 %v617, %v616
    %v646 = vpack.c.b16 %v619, %v618
    %v647 = vpack.c.b16 %v621, %v620
    %v648 = vpack.c.b16 %v623, %v622
    %v649 = vpack.c.b16 %v625, %v624
    %674 = vmatprep.subr.bf16.mxu0 0
    %675 = vmatpush1.bf16.msra.mxu0 %v626
    %676 = vmatprep.subr.bf16.mxu0 0
    %677 = vmatpush1.bf16.msra.mxu0 %v627
    %678 = vmatprep.subr.bf16.mxu0 0
    %679 = vmatpush1.bf16.msra.mxu0 %v628
    %680 = vmatprep.subr.bf16.mxu0 0
    %681 = vmatpush1.bf16.msra.mxu0 %v629
    %682 = vmatprep.subr.bf16.mxu0 0
    %683 = vmatpush1.bf16.msra.mxu0 %v630
    %684 = vmatprep.subr.bf16.mxu0 0
    %685 = vmatpush1.bf16.msra.mxu0 %v631
    %686 = vmatprep.subr.bf16.mxu0 0
    %687 = vmatpush1.bf16.msra.mxu0 %v632
    %688 = vmatprep.subr.bf16.mxu0 0
    %689 = vmatpush1.bf16.msra.mxu0 %v633
    %690 = vmatprep.subr.bf16.mxu0 0
    %691 = vmatpush1.bf16.msra.mxu0 %v634
    %692 = vmatprep.subr.bf16.mxu0 0
    %693 = vmatpush1.bf16.msra.mxu0 %v635
    %694 = vmatprep.subr.bf16.mxu0 0
    %695 = vmatpush1.bf16.msra.mxu0 %v636
    %696 = vmatprep.subr.bf16.mxu0 0
    %697 = vmatpush1.bf16.msra.mxu0 %v637
    %698 = vmatprep.subr.bf16.mxu0 0
    %699 = vmatpush1.bf16.msra.mxu0 %v638
    %700 = vmatprep.subr.bf16.mxu0 0
    %701 = vmatpush1.bf16.msra.mxu0 %v639
    %702 = vmatprep.subr.bf16.mxu0 0
    %703 = vmatpush1.bf16.msra.mxu0 %v640
    %704 = vmatprep.subr.bf16.mxu0 0
    %705 = vmatpush1.bf16.msra.mxu0 %v641
    %706 = vmatprep.mubr.bf16.mxu0 %v199
    %707 = vmatmul.mubr.bf16.gmra.mrb[0].mxu0 %v198
    %v708 = vpop.f32.mrb[0].mxu0
    %v709 = vadd.f32 %v525, %v708
    %v710 = vpop.f32.mrb[0].mxu0
    %v711 = vpop.f32.mrb[0].mxu0
    %v712 = vpop.f32.mrb[0].mxu0
    %713 = vdwg.mxu0
    %714 = vmatprep.subr.bf16.mxu0 0
    %715 = vmatpush1.bf16.msra.mxu0 %v642
    %716 = vmatprep.subr.bf16.mxu0 0
    %717 = vmatpush1.bf16.msra.mxu0 %v643
    %718 = vmatprep.subr.bf16.mxu0 0
    %719 = vmatpush1.bf16.msra.mxu0 %v644
    %720 = vmatprep.subr.bf16.mxu0 0
    %721 = vmatpush1.bf16.msra.mxu0 %v645
    %722 = vmatprep.subr.bf16.mxu0 0
    %723 = vmatpush1.bf16.msra.mxu0 %v646
    %724 = vmatprep.subr.bf16.mxu0 0
    %725 = vmatpush1.bf16.msra.mxu0 %v647
    %726 = vmatprep.subr.bf16.mxu0 0
    %727 = vmatpush1.bf16.msra.mxu0 %v648
    %728 = vmatprep.subr.bf16.mxu0 0
    %729 = vmatpush1.bf16.msra.mxu0 %v649
    %730 = vmatprep.subr.bf16.mxu0 0
    %731 = vmatpush1.bf16.msra.mxu0 0
    %732 = vmatprep.subr.bf16.mxu0 0
    %733 = vmatpush1.bf16.msra.mxu0 0
    %734 = vmatprep.subr.bf16.mxu0 0
    %735 = vmatpush1.bf16.msra.mxu0 0
    %736 = vmatprep.subr.bf16.mxu0 0
    %737 = vmatpush1.bf16.msra.mxu0 0
    %738 = vmatprep.subr.bf16.mxu0 0
    %739 = vmatpush1.bf16.msra.mxu0 0
    %740 = vmatprep.subr.bf16.mxu0 0
    %741 = vmatpush1.bf16.msra.mxu0 0
    %742 = vmatprep.subr.bf16.mxu0 0
    %743 = vmatpush1.bf16.msra.mxu0 0
    %744 = vmatprep.subr.bf16.mxu0 0
    %745 = vmatpush1.bf16.msra.mxu0 0
    %746 = vmatprep.mubr.bf16.mxu0 0
    %747 = vmatmul.mubr.bf16.gmra.mrb[0].mxu0 %v200
    %v748 = vpop.f32.mrb[0].mxu0
    %v749 = vadd.f32 %v709, %v748
    %v750 = vpop.f32.mrb[0].mxu0
    %v751 = vpop.f32.mrb[0].mxu0
    %v752 = vpop.f32.mrb[0].mxu0
    %753 = vdwg.mxu0
    %v754 = vld [vmem:[%s2 + $0x180] sm:$0xf]
    %v755 = vld [vmem:[%s2 + $0x184] sm:$0xf]
    %v756 = vld [vmem:[%s2 + $0x188] sm:$0xf]
    %v757 = vld [vmem:[%s2 + $0x18c] sm:$0xf]
    %v758 = vld [vmem:[%s2 + $0x190] sm:$0xf]
    %v759 = vld [vmem:[%s2 + $0x194] sm:$0xf]
    %v760 = vld [vmem:[%s2 + $0x198] sm:$0xf]
    %v761 = vld [vmem:[%s2 + $0x19c] sm:$0xf]
    %v762 = vld [vmem:[%s2 + $0x1a0] sm:$0xf]
    %v763 = vld [vmem:[%s2 + $0x1a4] sm:$0xf]
    %v764 = vld [vmem:[%s2 + $0x1a8] sm:$0xf]
    %v765 = vld [vmem:[%s2 + $0x1ac] sm:$0xf]
    %v766 = vld [vmem:[%s2 + $0x1b0] sm:$0xf]
    %v767 = vld [vmem:[%s2 + $0x1b4] sm:$0xf]
    %v768 = vld [vmem:[%s2 + $0x1b8] sm:$0xf]
    %v769 = vld [vmem:[%s2 + $0x1bc] sm:$0xf]
    %v770 = vld [vmem:[%s2 + $0x1c0] sm:$0xf]
    %v771 = vld [vmem:[%s2 + $0x1c4] sm:$0xf]
    %v772 = vld [vmem:[%s2 + $0x1c8] sm:$0xf]
    %v773 = vld [vmem:[%s2 + $0x1cc] sm:$0xf]
    %v774 = vld [vmem:[%s2 + $0x1d0] sm:$0xf]
    %v775 = vld [vmem:[%s2 + $0x1d4] sm:$0xf]
    %v776 = vld [vmem:[%s2 + $0x1d8] sm:$0xf]
    %v777 = vld [vmem:[%s2 + $0x1dc] sm:$0xf]
    %v778 = vld [vmem:[%s2 + $0x1e0] sm:$0xf]
    %v779 = vld [vmem:[%s2 + $0x1e4] sm:$0xf]
    %v780 = vld [vmem:[%s2 + $0x1e8] sm:$0xf]
    %v781 = vld [vmem:[%s2 + $0x1ec] sm:$0xf]
    %v782 = vld [vmem:[%s2 + $0x1f0] sm:$0xf]
    %v783 = vld [vmem:[%s2 + $0x1f4] sm:$0xf]
    %v784 = vld [vmem:[%s2 + $0x1f8] sm:$0xf]
    %v785 = vld [vmem:[%s2 + $0x1fc] sm:$0xf]
    %v786 = vld [vmem:[%s2 + $0x200] sm:$0xf]
    %v787 = vld [vmem:[%s2 + $0x204] sm:$0xf]
    %v788 = vld [vmem:[%s2 + $0x208] sm:$0xf]
    %v789 = vld [vmem:[%s2 + $0x20c] sm:$0xf]
    %v790 = vld [vmem:[%s2 + $0x210] sm:$0xf]
    %v791 = vld [vmem:[%s2 + $0x214] sm:$0xf]
    %v792 = vld [vmem:[%s2 + $0x218] sm:$0xf]
    %v793 = vld [vmem:[%s2 + $0x21c] sm:$0xf]
    %v794 = vld [vmem:[%s2 + $0x220] sm:$0xf]
    %v795 = vld [vmem:[%s2 + $0x224] sm:$0xf]
    %v796 = vld [vmem:[%s2 + $0x228] sm:$0xf]
    %v797 = vld [vmem:[%s2 + $0x22c] sm:$0xf]
    %v798 = vld [vmem:[%s2 + $0x230] sm:$0xf]
    %v799 = vld [vmem:[%s2 + $0x234] sm:$0xf]
    %v800 = vld [vmem:[%s2 + $0x238] sm:$0xf]
    %v801 = vld [vmem:[%s2 + $0x23c] sm:$0xf]
    %v802 = vrot.slane %v198, 2
    %v803 = vrot.slane %v199, 2
    %v804 = vrot.slane %v200, 2
    %v856 = vunpack.c.l.b16 %v754
    %v857 = vunpack.c.l.b16 %v755
    %v858 = vunpack.c.l.b16 %v756
    %v859 = vunpack.c.l.b16 %v757
    %v860 = vunpack.c.l.b16 %v758
    %v861 = vunpack.c.l.b16 %v759
    %v862 = vunpack.c.l.b16 %v760
    %v863 = vunpack.c.l.b16 %v761
    %v864 = vunpack.c.l.b16 %v762
    %v865 = vunpack.c.l.b16 %v763
    %v866 = vunpack.c.l.b16 %v764
    %v867 = vunpack.c.l.b16 %v765
    %v868 = vunpack.c.l.b16 %v766
    %v869 = vunpack.c.l.b16 %v767
    %v870 = vunpack.c.l.b16 %v768
    %v871 = vunpack.c.l.b16 %v769
    %v872 = vunpack.c.l.b16 %v770
    %v873 = vunpack.c.l.b16 %v771
    %v874 = vunpack.c.l.b16 %v772
    %v875 = vunpack.c.l.b16 %v773
    %v876 = vunpack.c.l.b16 %v774
    %v877 = vunpack.c.l.b16 %v775
    %v878 = vunpack.c.l.b16 %v776
    %v879 = vunpack.c.l.b16 %v777
    %v880 = vunpack.c.l.b16 %v778
    %v881 = vunpack.c.l.b16 %v779
    %v882 = vunpack.c.l.b16 %v780
    %v883 = vunpack.c.l.b16 %v781
    %v884 = vunpack.c.l.b16 %v782
    %v885 = vunpack.c.l.b16 %v783
    %v886 = vunpack.c.l.b16 %v784
    %v887 = vunpack.c.l.b16 %v785
    %v888 = vunpack.c.l.b16 %v786
    %v889 = vunpack.c.l.b16 %v787
    %v890 = vunpack.c.l.b16 %v788
    %v891 = vunpack.c.l.b16 %v789
    %v892 = vunpack.c.l.b16 %v790
    %v893 = vunpack.c.l.b16 %v791
    %v894 = vunpack.c.l.b16 %v792
    %v895 = vunpack.c.l.b16 %v793
    %v896 = vunpack.c.l.b16 %v794
    %v897 = vunpack.c.l.b16 %v795
    %v898 = vunpack.c.l.b16 %v796
    %v899 = vunpack.c.l.b16 %v797
    %v900 = vunpack.c.l.b16 %v798
    %v901 = vunpack.c.l.b16 %v799
    %v902 = vunpack.c.l.b16 %v800
    %v903 = vunpack.c.l.b16 %v801
    %v904 = vpack.c.b16 %v857, %v856
    %v905 = vpack.c.b16 %v859, %v858
    %v906 = vpack.c.b16 %v861, %v860
    %v907 = vpack.c.b16 %v863, %v862
    %v908 = vpack.c.b16 %v865, %v864
    %v909 = vpack.c.b16 %v867, %v866
    %v910 = vpack.c.b16 %v869, %v868
    %v911 = vpack.c.b16 %v871, %v870
    %v912 = vpack.c.b16 %v873, %v872
    %v913 = vpack.c.b16 %v875, %v874
    %v914 = vpack.c.b16 %v877, %v876
    %v915 = vpack.c.b16 %v879, %v878
    %v916 = vpack.c.b16 %v881, %v880
    %v917 = vpack.c.b16 %v883, %v882
    %v918 = vpack.c.b16 %v885, %v884
    %v919 = vpack.c.b16 %v887, %v886
    %v920 = vpack.c.b16 %v889, %v888
    %v921 = vpack.c.b16 %v891, %v890
    %v922 = vpack.c.b16 %v893, %v892
    %v923 = vpack.c.b16 %v895, %v894
    %v924 = vpack.c.b16 %v897, %v896
    %v925 = vpack.c.b16 %v899, %v898
    %v926 = vpack.c.b16 %v901, %v900
    %v927 = vpack.c.b16 %v903, %v902
    %952 = vmatprep.subr.bf16.mxu0 0
    %953 = vmatpush1.bf16.msra.mxu0 %v904
    %954 = vmatprep.subr.bf16.mxu0 0
    %955 = vmatpush1.bf16.msra.mxu0 %v905
    %956 = vmatprep.subr.bf16.mxu0 0
    %957 = vmatpush1.bf16.msra.mxu0 %v906
    %958 = vmatprep.subr.bf16.mxu0 0
    %959 = vmatpush1.bf16.msra.mxu0 %v907
    %960 = vmatprep.subr.bf16.mxu0 0
    %961 = vmatpush1.bf16.msra.mxu0 %v908
    %962 = vmatprep.subr.bf16.mxu0 0
    %963 = vmatpush1.bf16.msra.mxu0 %v909
    %964 = vmatprep.subr.bf16.mxu0 0
    %965 = vmatpush1.bf16.msra.mxu0 %v910
    %966 = vmatprep.subr.bf16.mxu0 0
    %967 = vmatpush1.bf16.msra.mxu0 %v911
    %968 = vmatprep.subr.bf16.mxu0 0
    %969 = vmatpush1.bf16.msra.mxu0 %v912
    %970 = vmatprep.subr.bf16.mxu0 0
    %971 = vmatpush1.bf16.msra.mxu0 %v913
    %972 = vmatprep.subr.bf16.mxu0 0
    %973 = vmatpush1.bf16.msra.mxu0 %v914
    %974 = vmatprep.subr.bf16.mxu0 0
    %975 = vmatpush1.bf16.msra.mxu0 %v915
    %976 = vmatprep.subr.bf16.mxu0 0
    %977 = vmatpush1.bf16.msra.mxu0 %v916
    %978 = vmatprep.subr.bf16.mxu0 0
    %979 = vmatpush1.bf16.msra.mxu0 %v917
    %980 = vmatprep.subr.bf16.mxu0 0
    %981 = vmatpush1.bf16.msra.mxu0 %v918
    %982 = vmatprep.subr.bf16.mxu0 0
    %983 = vmatpush1.bf16.msra.mxu0 %v919
    %984 = vmatprep.mubr.bf16.mxu0 %v803
    %985 = vmatmul.mubr.bf16.gmra.mrb[0].mxu0 %v802
    %v986 = vpop.f32.mrb[0].mxu0
    %v987 = vadd.f32 0.0, %v986
    %v988 = vpop.f32.mrb[0].mxu0
    %v989 = vpop.f32.mrb[0].mxu0
    %v990 = vpop.f32.mrb[0].mxu0
    %991 = vdwg.mxu0
    %992 = vmatprep.subr.bf16.mxu0 0
    %993 = vmatpush1.bf16.msra.mxu0 %v920
    %994 = vmatprep.subr.bf16.mxu0 0
    %995 = vmatpush1.bf16.msra.mxu0 %v921
    %996 = vmatprep.subr.bf16.mxu0 0
    %997 = vmatpush1.bf16.msra.mxu0 %v922
    %998 = vmatprep.subr.bf16.mxu0 0
    %999 = vmatpush1.bf16.msra.mxu0 %v923
    %1000 = vmatprep.subr.bf16.mxu0 0
    %1001 = vmatpush1.bf16.msra.mxu0 %v924
    %1002 = vmatprep.subr.bf16.mxu0 0
    %1003 = vmatpush1.bf16.msra.mxu0 %v925
    %1004 = vmatprep.subr.bf16.mxu0 0
    %1005 = vmatpush1.bf16.msra.mxu0 %v926
    %1006 = vmatprep.subr.bf16.mxu0 0
    %1007 = vmatpush1.bf16.msra.mxu0 %v927
    %1008 = vmatprep.subr.bf16.mxu0 0
    %1009 = vmatpush1.bf16.msra.mxu0 0
    %1010 = vmatprep.subr.bf16.mxu0 0
    %1011 = vmatpush1.bf16.msra.mxu0 0
    %1012 = vmatprep.subr.bf16.mxu0 0
    %1013 = vmatpush1.bf16.msra.mxu0 0
    %1014 = vmatprep.subr.bf16.mxu0 0
    %1015 = vmatpush1.bf16.msra.mxu0 0
    %1016 = vmatprep.subr.bf16.mxu0 0
    %1017 = vmatpush1.bf16.msra.mxu0 0
    %1018 = vmatprep.subr.bf16.mxu0 0
    %1019 = vmatpush1.bf16.msra.mxu0 0
    %1020 = vmatprep.subr.bf16.mxu0 0
    %1021 = vmatpush1.bf16.msra.mxu0 0
    %1022 = vmatprep.subr.bf16.mxu0 0
    %1023 = vmatpush1.bf16.msra.mxu0 0
    %1024 = vmatprep.mubr.bf16.mxu0 0
    %1025 = vmatmul.mubr.bf16.gmra.mrb[0].mxu0 %v804
    %v1026 = vpop.f32.mrb[0].mxu0
    %v1027 = vadd.f32 %v987, %v1026
    %v1028 = vpop.f32.mrb[0].mxu0
    %v1029 = vpop.f32.mrb[0].mxu0
    %v1030 = vpop.f32.mrb[0].mxu0
    %1031 = vdwg.mxu0
    %v1032 = vadd.f32 %v749, %v1027
    %v1033 = vld [vmem:[%s2 + $0x240] sm:$0xf]
    %v1034 = vld [vmem:[%s2 + $0x244] sm:$0xf]
    %v1035 = vld [vmem:[%s2 + $0x248] sm:$0xf]
    %v1036 = vld [vmem:[%s2 + $0x24c] sm:$0xf]
    %v1037 = vld [vmem:[%s2 + $0x250] sm:$0xf]
    %v1038 = vld [vmem:[%s2 + $0x254] sm:$0xf]
    %v1039 = vld [vmem:[%s2 + $0x258] sm:$0xf]
    %v1040 = vld [vmem:[%s2 + $0x25c] sm:$0xf]
    %v1041 = vld [vmem:[%s2 + $0x260] sm:$0xf]
    %v1042 = vld [vmem:[%s2 + $0x264] sm:$0xf]
    %v1043 = vld [vmem:[%s2 + $0x268] sm:$0xf]
    %v1044 = vld [vmem:[%s2 + $0x26c] sm:$0xf]
    %v1045 = vld [vmem:[%s2 + $0x270] sm:$0xf]
    %v1046 = vld [vmem:[%s2 + $0x274] sm:$0xf]
    %v1047 = vld [vmem:[%s2 + $0x278] sm:$0xf]
    %v1048 = vld [vmem:[%s2 + $0x27c] sm:$0xf]
    %v1049 = vld [vmem:[%s2 + $0x280] sm:$0xf]
    %v1050 = vld [vmem:[%s2 + $0x284] sm:$0xf]
    %v1051 = vld [vmem:[%s2 + $0x288] sm:$0xf]
    %v1052 = vld [vmem:[%s2 + $0x28c] sm:$0xf]
    %v1053 = vld [vmem:[%s2 + $0x290] sm:$0xf]
    %v1054 = vld [vmem:[%s2 + $0x294] sm:$0xf]
    %v1055 = vld [vmem:[%s2 + $0x298] sm:$0xf]
    %v1056 = vld [vmem:[%s2 + $0x29c] sm:$0xf]
    %v1057 = vld [vmem:[%s2 + $0x2a0] sm:$0xf]
    %v1058 = vld [vmem:[%s2 + $0x2a4] sm:$0xf]
    %v1059 = vld [vmem:[%s2 + $0x2a8] sm:$0xf]
    %v1060 = vld [vmem:[%s2 + $0x2ac] sm:$0xf]
    %v1061 = vld [vmem:[%s2 + $0x2b0] sm:$0xf]
    %v1062 = vld [vmem:[%s2 + $0x2b4] sm:$0xf]
    %v1063 = vld [vmem:[%s2 + $0x2b8] sm:$0xf]
    %v1064 = vld [vmem:[%s2 + $0x2bc] sm:$0xf]
    %v1065 = vld [vmem:[%s2 + $0x2c0] sm:$0xf]
    %v1066 = vld [vmem:[%s2 + $0x2c4] sm:$0xf]
    %v1067 = vld [vmem:[%s2 + $0x2c8] sm:$0xf]
    %v1068 = vld [vmem:[%s2 + $0x2cc] sm:$0xf]
    %v1069 = vld [vmem:[%s2 + $0x2d0] sm:$0xf]
    %v1070 = vld [vmem:[%s2 + $0x2d4] sm:$0xf]
    %v1071 = vld [vmem:[%s2 + $0x2d8] sm:$0xf]
    %v1072 = vld [vmem:[%s2 + $0x2dc] sm:$0xf]
    %v1073 = vld [vmem:[%s2 + $0x2e0] sm:$0xf]
    %v1074 = vld [vmem:[%s2 + $0x2e4] sm:$0xf]
    %v1075 = vld [vmem:[%s2 + $0x2e8] sm:$0xf]
    %v1076 = vld [vmem:[%s2 + $0x2ec] sm:$0xf]
    %v1077 = vld [vmem:[%s2 + $0x2f0] sm:$0xf]
    %v1078 = vld [vmem:[%s2 + $0x2f4] sm:$0xf]
    %v1079 = vld [vmem:[%s2 + $0x2f8] sm:$0xf]
    %v1080 = vld [vmem:[%s2 + $0x2fc] sm:$0xf]
    %v1081 = vrot.slane %v198, 3
    %v1082 = vrot.slane %v199, 3
    %v1083 = vrot.slane %v200, 3
    %v1135 = vunpack.c.l.b16 %v1033
    %v1136 = vunpack.c.l.b16 %v1034
    %v1137 = vunpack.c.l.b16 %v1035
    %v1138 = vunpack.c.l.b16 %v1036
    %v1139 = vunpack.c.l.b16 %v1037
    %v1140 = vunpack.c.l.b16 %v1038
    %v1141 = vunpack.c.l.b16 %v1039
    %v1142 = vunpack.c.l.b16 %v1040
    %v1143 = vunpack.c.l.b16 %v1041
    %v1144 = vunpack.c.l.b16 %v1042
    %v1145 = vunpack.c.l.b16 %v1043
    %v1146 = vunpack.c.l.b16 %v1044
    %v1147 = vunpack.c.l.b16 %v1045
    %v1148 = vunpack.c.l.b16 %v1046
    %v1149 = vunpack.c.l.b16 %v1047
    %v1150 = vunpack.c.l.b16 %v1048
    %v1151 = vunpack.c.l.b16 %v1049
    %v1152 = vunpack.c.l.b16 %v1050
    %v1153 = vunpack.c.l.b16 %v1051
    %v1154 = vunpack.c.l.b16 %v1052
    %v1155 = vunpack.c.l.b16 %v1053
    %v1156 = vunpack.c.l.b16 %v1054
    %v1157 = vunpack.c.l.b16 %v1055
    %v1158 = vunpack.c.l.b16 %v1056
    %v1159 = vunpack.c.l.b16 %v1057
    %v1160 = vunpack.c.l.b16 %v1058
    %v1161 = vunpack.c.l.b16 %v1059
    %v1162 = vunpack.c.l.b16 %v1060
    %v1163 = vunpack.c.l.b16 %v1061
    %v1164 = vunpack.c.l.b16 %v1062
    %v1165 = vunpack.c.l.b16 %v1063
    %v1166 = vunpack.c.l.b16 %v1064
    %v1167 = vunpack.c.l.b16 %v1065
    %v1168 = vunpack.c.l.b16 %v1066
    %v1169 = vunpack.c.l.b16 %v1067
    %v1170 = vunpack.c.l.b16 %v1068
    %v1171 = vunpack.c.l.b16 %v1069
    %v1172 = vunpack.c.l.b16 %v1070
    %v1173 = vunpack.c.l.b16 %v1071
    %v1174 = vunpack.c.l.b16 %v1072
    %v1175 = vunpack.c.l.b16 %v1073
    %v1176 = vunpack.c.l.b16 %v1074
    %v1177 = vunpack.c.l.b16 %v1075
    %v1178 = vunpack.c.l.b16 %v1076
    %v1179 = vunpack.c.l.b16 %v1077
    %v1180 = vunpack.c.l.b16 %v1078
    %v1181 = vunpack.c.l.b16 %v1079
    %v1182 = vunpack.c.l.b16 %v1080
    %v1183 = vpack.c.b16 %v1136, %v1135
    %v1184 = vpack.c.b16 %v1138, %v1137
    %v1185 = vpack.c.b16 %v1140, %v1139
    %v1186 = vpack.c.b16 %v1142, %v1141
    %v1187 = vpack.c.b16 %v1144, %v1143
    %v1188 = vpack.c.b16 %v1146, %v1145
    %v1189 = vpack.c.b16 %v1148, %v1147
    %v1190 = vpack.c.b16 %v1150, %v1149
    %v1191 = vpack.c.b16 %v1152, %v1151
    %v1192 = vpack.c.b16 %v1154, %v1153
    %v1193 = vpack.c.b16 %v1156, %v1155
    %v1194 = vpack.c.b16 %v1158, %v1157
    %v1195 = vpack.c.b16 %v1160, %v1159
    %v1196 = vpack.c.b16 %v1162, %v1161
    %v1197 = vpack.c.b16 %v1164, %v1163
    %v1198 = vpack.c.b16 %v1166, %v1165
    %v1199 = vpack.c.b16 %v1168, %v1167
    %v1200 = vpack.c.b16 %v1170, %v1169
    %v1201 = vpack.c.b16 %v1172, %v1171
    %v1202 = vpack.c.b16 %v1174, %v1173
    %v1203 = vpack.c.b16 %v1176, %v1175
    %v1204 = vpack.c.b16 %v1178, %v1177
    %v1205 = vpack.c.b16 %v1180, %v1179
    %v1206 = vpack.c.b16 %v1182, %v1181
    %1231 = vmatprep.subr.bf16.mxu0 0
    %1232 = vmatpush1.bf16.msra.mxu0 %v1183
    %1233 = vmatprep.subr.bf16.mxu0 0
    %1234 = vmatpush1.bf16.msra.mxu0 %v1184
    %1235 = vmatprep.subr.bf16.mxu0 0
    %1236 = vmatpush1.bf16.msra.mxu0 %v1185
    %1237 = vmatprep.subr.bf16.mxu0 0
    %1238 = vmatpush1.bf16.msra.mxu0 %v1186
    %1239 = vmatprep.subr.bf16.mxu0 0
    %1240 = vmatpush1.bf16.msra.mxu0 %v1187
    %1241 = vmatprep.subr.bf16.mxu0 0
    %1242 = vmatpush1.bf16.msra.mxu0 %v1188
    %1243 = vmatprep.subr.bf16.mxu0 0
    %1244 = vmatpush1.bf16.msra.mxu0 %v1189
    %1245 = vmatprep.subr.bf16.mxu0 0
    %1246 = vmatpush1.bf16.msra.mxu0 %v1190
    %1247 = vmatprep.subr.bf16.mxu0 0
    %1248 = vmatpush1.bf16.msra.mxu0 %v1191
    %1249 = vmatprep.subr.bf16.mxu0 0
    %1250 = vmatpush1.bf16.msra.mxu0 %v1192
    %1251 = vmatprep.subr.bf16.mxu0 0
    %1252 = vmatpush1.bf16.msra.mxu0 %v1193
    %1253 = vmatprep.subr.bf16.mxu0 0
    %1254 = vmatpush1.bf16.msra.mxu0 %v1194
    %1255 = vmatprep.subr.bf16.mxu0 0
    %1256 = vmatpush1.bf16.msra.mxu0 %v1195
    %1257 = vmatprep.subr.bf16.mxu0 0
    %1258 = vmatpush1.bf16.msra.mxu0 %v1196
    %1259 = vmatprep.subr.bf16.mxu0 0
    %1260 = vmatpush1.bf16.msra.mxu0 %v1197
    %1261 = vmatprep.subr.bf16.mxu0 0
    %1262 = vmatpush1.bf16.msra.mxu0 %v1198
    %1263 = vmatprep.mubr.bf16.mxu0 %v1082
    %1264 = vmatmul.mubr.bf16.gmra.mrb[0].mxu0 %v1081
    %v1265 = vpop.f32.mrb[0].mxu0
    %v1266 = vadd.f32 0.0, %v1265
    %v1267 = vpop.f32.mrb[0].mxu0
    %v1268 = vpop.f32.mrb[0].mxu0
    %v1269 = vpop.f32.mrb[0].mxu0
    %1270 = vdwg.mxu0
    %1271 = vmatprep.subr.bf16.mxu0 0
    %1272 = vmatpush1.bf16.msra.mxu0 %v1199
    %1273 = vmatprep.subr.bf16.mxu0 0
    %1274 = vmatpush1.bf16.msra.mxu0 %v1200
    %1275 = vmatprep.subr.bf16.mxu0 0
    %1276 = vmatpush1.bf16.msra.mxu0 %v1201
    %1277 = vmatprep.subr.bf16.mxu0 0
    %1278 = vmatpush1.bf16.msra.mxu0 %v1202
    %1279 = vmatprep.subr.bf16.mxu0 0
    %1280 = vmatpush1.bf16.msra.mxu0 %v1203
    %1281 = vmatprep.subr.bf16.mxu0 0
    %1282 = vmatpush1.bf16.msra.mxu0 %v1204
    %1283 = vmatprep.subr.bf16.mxu0 0
    %1284 = vmatpush1.bf16.msra.mxu0 %v1205
    %1285 = vmatprep.subr.bf16.mxu0 0
    %1286 = vmatpush1.bf16.msra.mxu0 %v1206
    %1287 = vmatprep.subr.bf16.mxu0 0
    %1288 = vmatpush1.bf16.msra.mxu0 0
    %1289 = vmatprep.subr.bf16.mxu0 0
    %1290 = vmatpush1.bf16.msra.mxu0 0
    %1291 = vmatprep.subr.bf16.mxu0 0
    %1292 = vmatpush1.bf16.msra.mxu0 0
    %1293 = vmatprep.subr.bf16.mxu0 0
    %1294 = vmatpush1.bf16.msra.mxu0 0
    %1295 = vmatprep.subr.bf16.mxu0 0
    %1296 = vmatpush1.bf16.msra.mxu0 0
    %1297 = vmatprep.subr.bf16.mxu0 0
    %1298 = vmatpush1.bf16.msra.mxu0 0
    %1299 = vmatprep.subr.bf16.mxu0 0
    %1300 = vmatpush1.bf16.msra.mxu0 0
    %1301 = vmatprep.subr.bf16.mxu0 0
    %1302 = vmatpush1.bf16.msra.mxu0 0
    %1303 = vmatprep.mubr.bf16.mxu0 0
    %1304 = vmatmul.mubr.bf16.gmra.mrb[0].mxu0 %v1083
    %v1305 = vpop.f32.mrb[0].mxu0
    %v1306 = vadd.f32 %v1266, %v1305
    %v1307 = vpop.f32.mrb[0].mxu0
    %v1308 = vpop.f32.mrb[0].mxu0
    %v1309 = vpop.f32.mrb[0].mxu0
    %1310 = vdwg.mxu0
    %v1311 = vadd.f32 %v1032, %v1306
    %v1313 = vlaneseq
    %v1314 = vshrl.u32 %v1313, 7
    %v1315 = vsub.s32 0, %v1314
    %v1316 = vrot.slane %v197, %v1315
    %v1318 = vadd.f32 %v1311, %v1316
    %v1319 = vld [vmem:[%s1] sm:$0xff]
    %v1320 = vld [vmem:[%s1 + $0x8] sm:$0xff]
    %v1323 = vcombine.high %v1319, %v1319
    %v1325 = vunpack.c.l.s4 1983009808
    %v1326 = vunpack.c.0.s8 %v1325
    %v1327 = vlaneseq
    %v1328 = vshrl.u32 %v1327, 7
    %v1329 = vsub.s32 %v1326, %v1328
    %v1330 = vrot.slane %v1319, %v1329
    %v1332 = vunpack.c.l.s4 1983009808
    %v1333 = vunpack.c.0.s8 %v1332
    %v1334 = vlaneseq
    %v1335 = vshrl.u32 %v1334, 7
    %v1336 = vsub.s32 %v1333, %v1335
    %v1337 = vrot.slane %v1323, %v1336
    %v1338 = vcombine.high %v1330, %v1330
    %v1339 = vcombine.high %v1337, %v1337
    %v1340 = vcombine.high %v1320, %v1320
    %v1342 = vunpack.c.l.s4 1983009808
    %v1343 = vunpack.c.0.s8 %v1342
    %v1344 = vlaneseq
    %v1345 = vshrl.u32 %v1344, 7
    %v1346 = vsub.s32 %v1343, %v1345
    %v1347 = vrot.slane %v1320, %v1346
    %v1349 = vunpack.c.l.s4 1983009808
    %v1350 = vunpack.c.0.s8 %v1349
    %v1351 = vlaneseq
    %v1352 = vshrl.u32 %v1351, 7
    %v1353 = vsub.s32 %v1350, %v1352
    %v1354 = vrot.slane %v1340, %v1353
    %v1355 = vcombine.high %v1347, %v1347
    %v1356 = vcombine.high %v1354, %v1354
    %v1365 = vpack.c.bf16 %v1330, %v1330
    %v1366 = vpack.c.bf16 %v1338, %v1338
    %v1367 = vpack.c.bf16 %v1337, %v1337
    %v1368 = vpack.c.bf16 %v1339, %v1339
    %v1369 = vpack.c.bf16 %v1347, %v1347
    %v1370 = vpack.c.bf16 %v1355, %v1355
    %v1371 = vpack.c.bf16 %v1354, %v1354
    %v1372 = vpack.c.bf16 %v1356, %v1356
    %v1373 = vld [vmem:[%s3] sm:$0xf]
    %v1374 = vld [vmem:[%s3 + $0x4] sm:$0xf]
    %v1375 = vld [vmem:[%s3 + $0x8] sm:$0xf]
    %v1376 = vld [vmem:[%s3 + $0xc] sm:$0xf]
    %v1377 = vld [vmem:[%s3 + $0x10] sm:$0xf]
    %v1378 = vld [vmem:[%s3 + $0x14] sm:$0xf]
    %v1379 = vld [vmem:[%s3 + $0x18] sm:$0xf]
    %v1380 = vld [vmem:[%s3 + $0x1c] sm:$0xf]
    %v1381 = vld [vmem:[%s3 + $0x20] sm:$0xf]
    %v1382 = vld [vmem:[%s3 + $0x24] sm:$0xf]
    %v1383 = vld [vmem:[%s3 + $0x28] sm:$0xf]
    %v1384 = vld [vmem:[%s3 + $0x2c] sm:$0xf]
    %v1385 = vld [vmem:[%s3 + $0x30] sm:$0xf]
    %v1386 = vld [vmem:[%s3 + $0x34] sm:$0xf]
    %v1387 = vld [vmem:[%s3 + $0x38] sm:$0xf]
    %v1388 = vld [vmem:[%s3 + $0x3c] sm:$0xf]
    %v1389 = vld [vmem:[%s3 + $0x40] sm:$0xf]
    %v1390 = vld [vmem:[%s3 + $0x44] sm:$0xf]
    %v1391 = vld [vmem:[%s3 + $0x48] sm:$0xf]
    %v1392 = vld [vmem:[%s3 + $0x4c] sm:$0xf]
    %v1393 = vld [vmem:[%s3 + $0x50] sm:$0xf]
    %v1394 = vld [vmem:[%s3 + $0x54] sm:$0xf]
    %v1395 = vld [vmem:[%s3 + $0x58] sm:$0xf]
    %v1396 = vld [vmem:[%s3 + $0x5c] sm:$0xf]
    %v1397 = vld [vmem:[%s3 + $0x60] sm:$0xf]
    %v1398 = vld [vmem:[%s3 + $0x64] sm:$0xf]
    %v1399 = vld [vmem:[%s3 + $0x68] sm:$0xf]
    %v1400 = vld [vmem:[%s3 + $0x6c] sm:$0xf]
    %v1401 = vld [vmem:[%s3 + $0x70] sm:$0xf]
    %v1402 = vld [vmem:[%s3 + $0x74] sm:$0xf]
    %v1403 = vld [vmem:[%s3 + $0x78] sm:$0xf]
    %v1404 = vld [vmem:[%s3 + $0x7c] sm:$0xf]
    %v1405 = vld [vmem:[%s3 + $0x80] sm:$0xf]
    %v1406 = vld [vmem:[%s3 + $0x84] sm:$0xf]
    %v1407 = vld [vmem:[%s3 + $0x88] sm:$0xf]
    %v1408 = vld [vmem:[%s3 + $0x8c] sm:$0xf]
    %v1409 = vld [vmem:[%s3 + $0x90] sm:$0xf]
    %v1410 = vld [vmem:[%s3 + $0x94] sm:$0xf]
    %v1411 = vld [vmem:[%s3 + $0x98] sm:$0xf]
    %v1412 = vld [vmem:[%s3 + $0x9c] sm:$0xf]
    %v1413 = vld [vmem:[%s3 + $0xa0] sm:$0xf]
    %v1414 = vld [vmem:[%s3 + $0xa4] sm:$0xf]
    %v1415 = vld [vmem:[%s3 + $0xa8] sm:$0xf]
    %v1416 = vld [vmem:[%s3 + $0xac] sm:$0xf]
    %v1417 = vld [vmem:[%s3 + $0xb0] sm:$0xf]
    %v1418 = vld [vmem:[%s3 + $0xb4] sm:$0xf]
    %v1419 = vld [vmem:[%s3 + $0xb8] sm:$0xf]
    %v1420 = vld [vmem:[%s3 + $0xbc] sm:$0xf]
    %v1421 = vld [vmem:[%s3 + $0xc0] sm:$0xf]
    %v1422 = vld [vmem:[%s3 + $0xc4] sm:$0xf]
    %v1423 = vld [vmem:[%s3 + $0xc8] sm:$0xf]
    %v1424 = vld [vmem:[%s3 + $0xcc] sm:$0xf]
    %v1425 = vld [vmem:[%s3 + $0xd0] sm:$0xf]
    %v1426 = vld [vmem:[%s3 + $0xd4] sm:$0xf]
    %v1427 = vld [vmem:[%s3 + $0xd8] sm:$0xf]
    %v1428 = vld [vmem:[%s3 + $0xdc] sm:$0xf]
    %v1429 = vld [vmem:[%s3 + $0xe0] sm:$0xf]
    %v1430 = vld [vmem:[%s3 + $0xe4] sm:$0xf]
    %v1431 = vld [vmem:[%s3 + $0xe8] sm:$0xf]
    %v1432 = vld [vmem:[%s3 + $0xec] sm:$0xf]
    %v1433 = vld [vmem:[%s3 + $0xf0] sm:$0xf]
    %v1434 = vld [vmem:[%s3 + $0xf4] sm:$0xf]
    %v1435 = vld [vmem:[%s3 + $0xf8] sm:$0xf]
    %v1436 = vld [vmem:[%s3 + $0xfc] sm:$0xf]
    %v1437 = vld [vmem:[%s3 + $0x100] sm:$0xf]
    %v1438 = vld [vmem:[%s3 + $0x104] sm:$0xf]
    %v1439 = vld [vmem:[%s3 + $0x108] sm:$0xf]
    %v1440 = vld [vmem:[%s3 + $0x10c] sm:$0xf]
    %v1441 = vld [vmem:[%s3 + $0x110] sm:$0xf]
    %v1442 = vld [vmem:[%s3 + $0x114] sm:$0xf]
    %v1443 = vld [vmem:[%s3 + $0x118] sm:$0xf]
    %v1444 = vld [vmem:[%s3 + $0x11c] sm:$0xf]
    %v1445 = vld [vmem:[%s3 + $0x120] sm:$0xf]
    %v1446 = vld [vmem:[%s3 + $0x124] sm:$0xf]
    %v1447 = vld [vmem:[%s3 + $0x128] sm:$0xf]
    %v1448 = vld [vmem:[%s3 + $0x12c] sm:$0xf]
    %v1449 = vld [vmem:[%s3 + $0x130] sm:$0xf]
    %v1450 = vld [vmem:[%s3 + $0x134] sm:$0xf]
    %v1451 = vld [vmem:[%s3 + $0x138] sm:$0xf]
    %v1452 = vld [vmem:[%s3 + $0x13c] sm:$0xf]
    %v1453 = vld [vmem:[%s3 + $0x140] sm:$0xf]
    %v1454 = vld [vmem:[%s3 + $0x144] sm:$0xf]
    %v1455 = vld [vmem:[%s3 + $0x148] sm:$0xf]
    %v1456 = vld [vmem:[%s3 + $0x14c] sm:$0xf]
    %v1457 = vld [vmem:[%s3 + $0x150] sm:$0xf]
    %v1458 = vld [vmem:[%s3 + $0x154] sm:$0xf]
    %v1459 = vld [vmem:[%s3 + $0x158] sm:$0xf]
    %v1460 = vld [vmem:[%s3 + $0x15c] sm:$0xf]
    %v1461 = vld [vmem:[%s3 + $0x160] sm:$0xf]
    %v1462 = vld [vmem:[%s3 + $0x164] sm:$0xf]
    %v1463 = vld [vmem:[%s3 + $0x168] sm:$0xf]
    %v1464 = vld [vmem:[%s3 + $0x16c] sm:$0xf]
    %v1465 = vld [vmem:[%s3 + $0x170] sm:$0xf]
    %v1466 = vld [vmem:[%s3 + $0x174] sm:$0xf]
    %v1467 = vld [vmem:[%s3 + $0x178] sm:$0xf]
    %v1468 = vld [vmem:[%s3 + $0x17c] sm:$0xf]
    %v1469 = vld [vmem:[%s3 + $0x180] sm:$0xf]
    %v1470 = vld [vmem:[%s3 + $0x184] sm:$0xf]
    %v1471 = vld [vmem:[%s3 + $0x188] sm:$0xf]
    %v1472 = vld [vmem:[%s3 + $0x18c] sm:$0xf]
    %v1473 = vld [vmem:[%s3 + $0x190] sm:$0xf]
    %v1474 = vld [vmem:[%s3 + $0x194] sm:$0xf]
    %v1475 = vld [vmem:[%s3 + $0x198] sm:$0xf]
    %v1476 = vld [vmem:[%s3 + $0x19c] sm:$0xf]
    %v1477 = vld [vmem:[%s3 + $0x1a0] sm:$0xf]
    %v1478 = vld [vmem:[%s3 + $0x1a4] sm:$0xf]
    %v1479 = vld [vmem:[%s3 + $0x1a8] sm:$0xf]
    %v1480 = vld [vmem:[%s3 + $0x1ac] sm:$0xf]
    %v1481 = vld [vmem:[%s3 + $0x1b0] sm:$0xf]
    %v1482 = vld [vmem:[%s3 + $0x1b4] sm:$0xf]
    %v1483 = vld [vmem:[%s3 + $0x1b8] sm:$0xf]
    %v1484 = vld [vmem:[%s3 + $0x1bc] sm:$0xf]
    %v1485 = vld [vmem:[%s3 + $0x1c0] sm:$0xf]
    %v1486 = vld [vmem:[%s3 + $0x1c4] sm:$0xf]
    %v1487 = vld [vmem:[%s3 + $0x1c8] sm:$0xf]
    %v1488 = vld [vmem:[%s3 + $0x1cc] sm:$0xf]
    %v1489 = vld [vmem:[%s3 + $0x1d0] sm:$0xf]
    %v1490 = vld [vmem:[%s3 + $0x1d4] sm:$0xf]
    %v1491 = vld [vmem:[%s3 + $0x1d8] sm:$0xf]
    %v1492 = vld [vmem:[%s3 + $0x1dc] sm:$0xf]
    %v1493 = vld [vmem:[%s3 + $0x1e0] sm:$0xf]
    %v1494 = vld [vmem:[%s3 + $0x1e4] sm:$0xf]
    %v1495 = vld [vmem:[%s3 + $0x1e8] sm:$0xf]
    %v1496 = vld [vmem:[%s3 + $0x1ec] sm:$0xf]
    %v1497 = vld [vmem:[%s3 + $0x1f0] sm:$0xf]
    %v1498 = vld [vmem:[%s3 + $0x1f4] sm:$0xf]
    %v1499 = vld [vmem:[%s3 + $0x1f8] sm:$0xf]
    %v1500 = vld [vmem:[%s3 + $0x1fc] sm:$0xf]
    %v1629 = vunpack.c.l.b16 %v1373
    %v1630 = vunpack.c.l.b16 %v1374
    %v1631 = vunpack.c.l.b16 %v1375
    %v1632 = vunpack.c.l.b16 %v1376
    %v1633 = vunpack.c.l.b16 %v1377
    %v1634 = vunpack.c.l.b16 %v1378
    %v1635 = vunpack.c.l.b16 %v1379
    %v1636 = vunpack.c.l.b16 %v1380
    %v1637 = vunpack.c.l.b16 %v1381
    %v1638 = vunpack.c.l.b16 %v1382
    %v1639 = vunpack.c.l.b16 %v1383
    %v1640 = vunpack.c.l.b16 %v1384
    %v1641 = vunpack.c.l.b16 %v1385
    %v1642 = vunpack.c.l.b16 %v1386
    %v1643 = vunpack.c.l.b16 %v1387
    %v1644 = vunpack.c.l.b16 %v1388
    %v1645 = vunpack.c.l.b16 %v1389
    %v1646 = vunpack.c.l.b16 %v1390
    %v1647 = vunpack.c.l.b16 %v1391
    %v1648 = vunpack.c.l.b16 %v1392
    %v1649 = vunpack.c.l.b16 %v1393
    %v1650 = vunpack.c.l.b16 %v1394
    %v1651 = vunpack.c.l.b16 %v1395
    %v1652 = vunpack.c.l.b16 %v1396
    %v1653 = vunpack.c.l.b16 %v1397
    %v1654 = vunpack.c.l.b16 %v1398
    %v1655 = vunpack.c.l.b16 %v1399
    %v1656 = vunpack.c.l.b16 %v1400
    %v1657 = vunpack.c.l.b16 %v1401
    %v1658 = vunpack.c.l.b16 %v1402
    %v1659 = vunpack.c.l.b16 %v1403
    %v1660 = vunpack.c.l.b16 %v1404
    %v1661 = vunpack.c.l.b16 %v1405
    %v1662 = vunpack.c.l.b16 %v1406
    %v1663 = vunpack.c.l.b16 %v1407
    %v1664 = vunpack.c.l.b16 %v1408
    %v1665 = vunpack.c.l.b16 %v1409
    %v1666 = vunpack.c.l.b16 %v1410
    %v1667 = vunpack.c.l.b16 %v1411
    %v1668 = vunpack.c.l.b16 %v1412
    %v1669 = vunpack.c.l.b16 %v1413
    %v1670 = vunpack.c.l.b16 %v1414
    %v1671 = vunpack.c.l.b16 %v1415
    %v1672 = vunpack.c.l.b16 %v1416
    %v1673 = vunpack.c.l.b16 %v1417
    %v1674 = vunpack.c.l.b16 %v1418
    %v1675 = vunpack.c.l.b16 %v1419
    %v1676 = vunpack.c.l.b16 %v1420
    %v1677 = vunpack.c.l.b16 %v1421
    %v1678 = vunpack.c.l.b16 %v1422
    %v1679 = vunpack.c.l.b16 %v1423
    %v1680 = vunpack.c.l.b16 %v1424
    %v1681 = vunpack.c.l.b16 %v1425
    %v1682 = vunpack.c.l.b16 %v1426
    %v1683 = vunpack.c.l.b16 %v1427
    %v1684 = vunpack.c.l.b16 %v1428
    %v1685 = vunpack.c.l.b16 %v1429
    %v1686 = vunpack.c.l.b16 %v1430
    %v1687 = vunpack.c.l.b16 %v1431
    %v1688 = vunpack.c.l.b16 %v1432
    %v1689 = vunpack.c.l.b16 %v1433
    %v1690 = vunpack.c.l.b16 %v1434
    %v1691 = vunpack.c.l.b16 %v1435
    %v1692 = vunpack.c.l.b16 %v1436
    %v1693 = vunpack.c.l.b16 %v1437
    %v1694 = vunpack.c.l.b16 %v1438
    %v1695 = vunpack.c.l.b16 %v1439
    %v1696 = vunpack.c.l.b16 %v1440
    %v1697 = vunpack.c.l.b16 %v1441
    %v1698 = vunpack.c.l.b16 %v1442
    %v1699 = vunpack.c.l.b16 %v1443
    %v1700 = vunpack.c.l.b16 %v1444
    %v1701 = vunpack.c.l.b16 %v1445
    %v1702 = vunpack.c.l.b16 %v1446
    %v1703 = vunpack.c.l.b16 %v1447
    %v1704 = vunpack.c.l.b16 %v1448
    %v1705 = vunpack.c.l.b16 %v1449
    %v1706 = vunpack.c.l.b16 %v1450
    %v1707 = vunpack.c.l.b16 %v1451
    %v1708 = vunpack.c.l.b16 %v1452
    %v1709 = vunpack.c.l.b16 %v1453
    %v1710 = vunpack.c.l.b16 %v1454
    %v1711 = vunpack.c.l.b16 %v1455
    %v1712 = vunpack.c.l.b16 %v1456
    %v1713 = vunpack.c.l.b16 %v1457
    %v1714 = vunpack.c.l.b16 %v1458
    %v1715 = vunpack.c.l.b16 %v1459
    %v1716 = vunpack.c.l.b16 %v1460
    %v1717 = vunpack.c.l.b16 %v1461
    %v1718 = vunpack.c.l.b16 %v1462
    %v1719 = vunpack.c.l.b16 %v1463
    %v1720 = vunpack.c.l.b16 %v1464
    %v1721 = vunpack.c.l.b16 %v1465
    %v1722 = vunpack.c.l.b16 %v1466
    %v1723 = vunpack.c.l.b16 %v1467
    %v1724 = vunpack.c.l.b16 %v1468
    %v1725 = vunpack.c.l.b16 %v1469
    %v1726 = vunpack.c.l.b16 %v1470
    %v1727 = vunpack.c.l.b16 %v1471
    %v1728 = vunpack.c.l.b16 %v1472
    %v1729 = vunpack.c.l.b16 %v1473
    %v1730 = vunpack.c.l.b16 %v1474
    %v1731 = vunpack.c.l.b16 %v1475
    %v1732 = vunpack.c.l.b16 %v1476
    %v1733 = vunpack.c.l.b16 %v1477
    %v1734 = vunpack.c.l.b16 %v1478
    %v1735 = vunpack.c.l.b16 %v1479
    %v1736 = vunpack.c.l.b16 %v1480
    %v1737 = vunpack.c.l.b16 %v1481
    %v1738 = vunpack.c.l.b16 %v1482
    %v1739 = vunpack.c.l.b16 %v1483
    %v1740 = vunpack.c.l.b16 %v1484
    %v1741 = vunpack.c.l.b16 %v1485
    %v1742 = vunpack.c.l.b16 %v1486
    %v1743 = vunpack.c.l.b16 %v1487
    %v1744 = vunpack.c.l.b16 %v1488
    %v1745 = vunpack.c.l.b16 %v1489
    %v1746 = vunpack.c.l.b16 %v1490
    %v1747 = vunpack.c.l.b16 %v1491
    %v1748 = vunpack.c.l.b16 %v1492
    %v1749 = vunpack.c.l.b16 %v1493
    %v1750 = vunpack.c.l.b16 %v1494
    %v1751 = vunpack.c.l.b16 %v1495
    %v1752 = vunpack.c.l.b16 %v1496
    %v1753 = vunpack.c.l.b16 %v1497
    %v1754 = vunpack.c.l.b16 %v1498
    %v1755 = vunpack.c.l.b16 %v1499
    %v1756 = vunpack.c.l.b16 %v1500
    %v1757 = vpack.c.b16 %v1630, %v1629
    %v1758 = vpack.c.b16 %v1632, %v1631
    %v1759 = vpack.c.b16 %v1634, %v1633
    %v1760 = vpack.c.b16 %v1636, %v1635
    %v1761 = vpack.c.b16 %v1638, %v1637
    %v1762 = vpack.c.b16 %v1640, %v1639
    %v1763 = vpack.c.b16 %v1642, %v1641
    %v1764 = vpack.c.b16 %v1644, %v1643
    %v1765 = vpack.c.b16 %v1646, %v1645
    %v1766 = vpack.c.b16 %v1648, %v1647
    %v1767 = vpack.c.b16 %v1650, %v1649
    %v1768 = vpack.c.b16 %v1652, %v1651
    %v1769 = vpack.c.b16 %v1654, %v1653
    %v1770 = vpack.c.b16 %v1656, %v1655
    %v1771 = vpack.c.b16 %v1658, %v1657
    %v1772 = vpack.c.b16 %v1660, %v1659
    %v1773 = vpack.c.b16 %v1662, %v1661
    %v1774 = vpack.c.b16 %v1664, %v1663
    %v1775 = vpack.c.b16 %v1666, %v1665
    %v1776 = vpack.c.b16 %v1668, %v1667
    %v1777 = vpack.c.b16 %v1670, %v1669
    %v1778 = vpack.c.b16 %v1672, %v1671
    %v1779 = vpack.c.b16 %v1674, %v1673
    %v1780 = vpack.c.b16 %v1676, %v1675
    %v1781 = vpack.c.b16 %v1678, %v1677
    %v1782 = vpack.c.b16 %v1680, %v1679
    %v1783 = vpack.c.b16 %v1682, %v1681
    %v1784 = vpack.c.b16 %v1684, %v1683
    %v1785 = vpack.c.b16 %v1686, %v1685
    %v1786 = vpack.c.b16 %v1688, %v1687
    %v1787 = vpack.c.b16 %v1690, %v1689
    %v1788 = vpack.c.b16 %v1692, %v1691
    %v1789 = vpack.c.b16 %v1694, %v1693
    %v1790 = vpack.c.b16 %v1696, %v1695
    %v1791 = vpack.c.b16 %v1698, %v1697
    %v1792 = vpack.c.b16 %v1700, %v1699
    %v1793 = vpack.c.b16 %v1702, %v1701
    %v1794 = vpack.c.b16 %v1704, %v1703
    %v1795 = vpack.c.b16 %v1706, %v1705
    %v1796 = vpack.c.b16 %v1708, %v1707
    %v1797 = vpack.c.b16 %v1710, %v1709
    %v1798 = vpack.c.b16 %v1712, %v1711
    %v1799 = vpack.c.b16 %v1714, %v1713
    %v1800 = vpack.c.b16 %v1716, %v1715
    %v1801 = vpack.c.b16 %v1718, %v1717
    %v1802 = vpack.c.b16 %v1720, %v1719
    %v1803 = vpack.c.b16 %v1722, %v1721
    %v1804 = vpack.c.b16 %v1724, %v1723
    %v1805 = vpack.c.b16 %v1726, %v1725
    %v1806 = vpack.c.b16 %v1728, %v1727
    %v1807 = vpack.c.b16 %v1730, %v1729
    %v1808 = vpack.c.b16 %v1732, %v1731
    %v1809 = vpack.c.b16 %v1734, %v1733
    %v1810 = vpack.c.b16 %v1736, %v1735
    %v1811 = vpack.c.b16 %v1738, %v1737
    %v1812 = vpack.c.b16 %v1740, %v1739
    %v1813 = vpack.c.b16 %v1742, %v1741
    %v1814 = vpack.c.b16 %v1744, %v1743
    %v1815 = vpack.c.b16 %v1746, %v1745
    %v1816 = vpack.c.b16 %v1748, %v1747
    %v1817 = vpack.c.b16 %v1750, %v1749
    %v1818 = vpack.c.b16 %v1752, %v1751
    %v1819 = vpack.c.b16 %v1754, %v1753
    %v1820 = vpack.c.b16 %v1756, %v1755
    %1885 = vmatprep.subr.bf16.mxu0 0
    %1886 = vmatpush1.bf16.msra.mxu0 %v1757
    %1887 = vmatprep.subr.bf16.mxu0 0
    %1888 = vmatpush1.bf16.msra.mxu0 %v1758
    %1889 = vmatprep.subr.bf16.mxu0 0
    %1890 = vmatpush1.bf16.msra.mxu0 %v1759
    %1891 = vmatprep.subr.bf16.mxu0 0
    %1892 = vmatpush1.bf16.msra.mxu0 %v1760
    %1893 = vmatprep.subr.bf16.mxu0 0
    %1894 = vmatpush1.bf16.msra.mxu0 %v1761
    %1895 = vmatprep.subr.bf16.mxu0 0
    %1896 = vmatpush1.bf16.msra.mxu0 %v1762
    %1897 = vmatprep.subr.bf16.mxu0 0
    %1898 = vmatpush1.bf16.msra.mxu0 %v1763
    %1899 = vmatprep.subr.bf16.mxu0 0
    %1900 = vmatpush1.bf16.msra.mxu0 %v1764
    %1901 = vmatprep.subr.bf16.mxu0 0
    %1902 = vmatpush1.bf16.msra.mxu0 %v1765
    %1903 = vmatprep.subr.bf16.mxu0 0
    %1904 = vmatpush1.bf16.msra.mxu0 %v1766
    %1905 = vmatprep.subr.bf16.mxu0 0
    %1906 = vmatpush1.bf16.msra.mxu0 %v1767
    %1907 = vmatprep.subr.bf16.mxu0 0
    %1908 = vmatpush1.bf16.msra.mxu0 %v1768
    %1909 = vmatprep.subr.bf16.mxu0 0
    %1910 = vmatpush1.bf16.msra.mxu0 %v1769
    %1911 = vmatprep.subr.bf16.mxu0 0
    %1912 = vmatpush1.bf16.msra.mxu0 %v1770
    %1913 = vmatprep.subr.bf16.mxu0 0
    %1914 = vmatpush1.bf16.msra.mxu0 %v1771
    %1915 = vmatprep.subr.bf16.mxu0 0
    %1916 = vmatpush1.bf16.msra.mxu0 %v1772
    %1917 = vmatprep.mubr.bf16.mxu0 %v1366
    %1918 = vmatmul.mubr.bf16.gmra.mrb[0].mxu0 %v1365
    %v1919 = vpop.f32.mrb[0].mxu0
    %v1920 = vadd.f32 0.0, %v1919
    %v1921 = vpop.f32.mrb[0].mxu0
    %v1922 = vpop.f32.mrb[0].mxu0
    %v1923 = vpop.f32.mrb[0].mxu0
    %1924 = vdwg.mxu0
    %1925 = vmatprep.subr.bf16.mxu0 0
    %1926 = vmatpush1.bf16.msra.mxu0 %v1773
    %1927 = vmatprep.subr.bf16.mxu0 0
    %1928 = vmatpush1.bf16.msra.mxu0 %v1774
    %1929 = vmatprep.subr.bf16.mxu0 0
    %1930 = vmatpush1.bf16.msra.mxu0 %v1775
    %1931 = vmatprep.subr.bf16.mxu0 0
    %1932 = vmatpush1.bf16.msra.mxu0 %v1776
    %1933 = vmatprep.subr.bf16.mxu0 0
    %1934 = vmatpush1.bf16.msra.mxu0 %v1777
    %1935 = vmatprep.subr.bf16.mxu0 0
    %1936 = vmatpush1.bf16.msra.mxu0 %v1778
    %1937 = vmatprep.subr.bf16.mxu0 0
    %1938 = vmatpush1.bf16.msra.mxu0 %v1779
    %1939 = vmatprep.subr.bf16.mxu0 0
    %1940 = vmatpush1.bf16.msra.mxu0 %v1780
    %1941 = vmatprep.subr.bf16.mxu0 0
    %1942 = vmatpush1.bf16.msra.mxu0 %v1781
    %1943 = vmatprep.subr.bf16.mxu0 0
    %1944 = vmatpush1.bf16.msra.mxu0 %v1782
    %1945 = vmatprep.subr.bf16.mxu0 0
    %1946 = vmatpush1.bf16.msra.mxu0 %v1783
    %1947 = vmatprep.subr.bf16.mxu0 0
    %1948 = vmatpush1.bf16.msra.mxu0 %v1784
    %1949 = vmatprep.subr.bf16.mxu0 0
    %1950 = vmatpush1.bf16.msra.mxu0 %v1785
    %1951 = vmatprep.subr.bf16.mxu0 0
    %1952 = vmatpush1.bf16.msra.mxu0 %v1786
    %1953 = vmatprep.subr.bf16.mxu0 0
    %1954 = vmatpush1.bf16.msra.mxu0 %v1787
    %1955 = vmatprep.subr.bf16.mxu0 0
    %1956 = vmatpush1.bf16.msra.mxu0 %v1788
    %1957 = vmatprep.mubr.bf16.mxu0 %v1368
    %1958 = vmatmul.mubr.bf16.gmra.mrb[0].mxu0 %v1367
    %v1959 = vpop.f32.mrb[0].mxu0
    %v1960 = vadd.f32 %v1920, %v1959
    %v1961 = vpop.f32.mrb[0].mxu0
    %v1962 = vpop.f32.mrb[0].mxu0
    %v1963 = vpop.f32.mrb[0].mxu0
    %1964 = vdwg.mxu0
    %1965 = vmatprep.subr.bf16.mxu0 0
    %1966 = vmatpush1.bf16.msra.mxu0 %v1789
    %1967 = vmatprep.subr.bf16.mxu0 0
    %1968 = vmatpush1.bf16.msra.mxu0 %v1790
    %1969 = vmatprep.subr.bf16.mxu0 0
    %1970 = vmatpush1.bf16.msra.mxu0 %v1791
    %1971 = vmatprep.subr.bf16.mxu0 0
    %1972 = vmatpush1.bf16.msra.mxu0 %v1792
    %1973 = vmatprep.subr.bf16.mxu0 0
    %1974 = vmatpush1.bf16.msra.mxu0 %v1793
    %1975 = vmatprep.subr.bf16.mxu0 0
    %1976 = vmatpush1.bf16.msra.mxu0 %v1794
    %1977 = vmatprep.subr.bf16.mxu0 0
    %1978 = vmatpush1.bf16.msra.mxu0 %v1795
    %1979 = vmatprep.subr.bf16.mxu0 0
    %1980 = vmatpush1.bf16.msra.mxu0 %v1796
    %1981 = vmatprep.subr.bf16.mxu0 0
    %1982 = vmatpush1.bf16.msra.mxu0 %v1797
    %1983 = vmatprep.subr.bf16.mxu0 0
    %1984 = vmatpush1.bf16.msra.mxu0 %v1798
    %1985 = vmatprep.subr.bf16.mxu0 0
    %1986 = vmatpush1.bf16.msra.mxu0 %v1799
    %1987 = vmatprep.subr.bf16.mxu0 0
    %1988 = vmatpush1.bf16.msra.mxu0 %v1800
    %1989 = vmatprep.subr.bf16.mxu0 0
    %1990 = vmatpush1.bf16.msra.mxu0 %v1801
    %1991 = vmatprep.subr.bf16.mxu0 0
    %1992 = vmatpush1.bf16.msra.mxu0 %v1802
    %1993 = vmatprep.subr.bf16.mxu0 0
    %1994 = vmatpush1.bf16.msra.mxu0 %v1803
    %1995 = vmatprep.subr.bf16.mxu0 0
    %1996 = vmatpush1.bf16.msra.mxu0 %v1804
    %1997 = vmatprep.mubr.bf16.mxu0 %v1370
    %1998 = vmatmul.mubr.bf16.gmra.mrb[0].mxu0 %v1369
    %v1999 = vpop.f32.mrb[0].mxu0
    %v2000 = vadd.f32 %v1960, %v1999
    %v2001 = vpop.f32.mrb[0].mxu0
    %v2002 = vpop.f32.mrb[0].mxu0
    %v2003 = vpop.f32.mrb[0].mxu0
    %2004 = vdwg.mxu0
    %2005 = vmatprep.subr.bf16.mxu0 0
    %2006 = vmatpush1.bf16.msra.mxu0 %v1805
    %2007 = vmatprep.subr.bf16.mxu0 0
    %2008 = vmatpush1.bf16.msra.mxu0 %v1806
    %2009 = vmatprep.subr.bf16.mxu0 0
    %2010 = vmatpush1.bf16.msra.mxu0 %v1807
    %2011 = vmatprep.subr.bf16.mxu0 0
    %2012 = vmatpush1.bf16.msra.mxu0 %v1808
    %2013 = vmatprep.subr.bf16.mxu0 0
    %2014 = vmatpush1.bf16.msra.mxu0 %v1809
    %2015 = vmatprep.subr.bf16.mxu0 0
    %2016 = vmatpush1.bf16.msra.mxu0 %v1810
    %2017 = vmatprep.subr.bf16.mxu0 0
    %2018 = vmatpush1.bf16.msra.mxu0 %v1811
    %2019 = vmatprep.subr.bf16.mxu0 0
    %2020 = vmatpush1.bf16.msra.mxu0 %v1812
    %2021 = vmatprep.subr.bf16.mxu0 0
    %2022 = vmatpush1.bf16.msra.mxu0 %v1813
    %2023 = vmatprep.subr.bf16.mxu0 0
    %2024 = vmatpush1.bf16.msra.mxu0 %v1814
    %2025 = vmatprep.subr.bf16.mxu0 0
    %2026 = vmatpush1.bf16.msra.mxu0 %v1815
    %2027 = vmatprep.subr.bf16.mxu0 0
    %2028 = vmatpush1.bf16.msra.mxu0 %v1816
    %2029 = vmatprep.subr.bf16.mxu0 0
    %2030 = vmatpush1.bf16.msra.mxu0 %v1817
    %2031 = vmatprep.subr.bf16.mxu0 0
    %2032 = vmatpush1.bf16.msra.mxu0 %v1818
    %2033 = vmatprep.subr.bf16.mxu0 0
    %2034 = vmatpush1.bf16.msra.mxu0 %v1819
    %2035 = vmatprep.subr.bf16.mxu0 0
    %2036 = vmatpush1.bf16.msra.mxu0 %v1820
    %2037 = vmatprep.mubr.bf16.mxu0 %v1372
    %2038 = vmatmul.mubr.bf16.gmra.mrb[0].mxu0 %v1371
    %v2039 = vpop.f32.mrb[0].mxu0
    %v2040 = vadd.f32 %v2000, %v2039
    %v2041 = vpop.f32.mrb[0].mxu0
    %v2042 = vpop.f32.mrb[0].mxu0
    %v2043 = vpop.f32.mrb[0].mxu0
    %2044 = vdwg.mxu0
    %2045 = vrot.lane.b32.xlu0 %v1316, 118
    %v2046 = vpop.permute.xlu0 %2045
    %v2048 = vadd.f32 %v2040, %v2046
    %vm2049 = vcmask 74752
    %v2050 = vsel %vm2049, %v1318, -inf
    %2051 = vmax.xlane.f32.xlu0 %v2050
    %v2052 = vpop.xlane.xlu0 %2051
    %v2053 = vsub.f32 %v1318, %v2052
    %v2054 = vmul.f32 %v2053, 1.442695
    %v2055 = vpow.pop %v2054
    %v2056 = vsel %vm2049, %v2055, 0.0
    %2057 = vadd.xlane.f32.xlu0 %v2056
    %v2058 = vpop.xlane.xlu0 %2057
    %v2059 = vrcp.pop %v2058
    %v2060 = vmul.f32 %v2055, %v2059
    %v2061 = vmul.f32 %v2060, 0.5
    %v2062 = vsel %vm2049, %v2048, -inf
    %2063 = vmax.xlane.f32.xlu0 %v2062
    %v2064 = vpop.xlane.xlu0 %2063
    %v2065 = vsub.f32 %v2048, %v2064
    %v2066 = vmul.f32 %v2065, 1.442695
    %v2067 = vpow.pop %v2066
    %v2068 = vsel %vm2049, %v2067, 0.0
    %2069 = vadd.xlane.f32.xlu0 %v2068
    %v2070 = vpop.xlane.xlu0 %2069
    %v2071 = vrcp.pop %v2070
    %v2072 = vmul.f32 %v2067, %v2071
    %v2073 = vmul.f32 %v2072, 0.3
    %v2074 = vadd.f32 %v2061, %v2073
    %vm2075 = vcmask 156752
    %v2076 = vsel %vm2075, %v2048, -inf
    %2077 = vmax.xlane.f32.xlu0 %v2076
    %v2078 = vpop.xlane.xlu0 %2077
    %v2079 = vsub.f32 %v2048, %v2078
    %v2080 = vmul.f32 %v2079, 1.442695
    %v2081 = vpow.pop %v2080
    %2083 = vrot.lane.b32.xlu0 %v2081, 118
    %v2084 = vpop.permute.xlu0 %2083
    %v2086 = vsel %vm2049, %v2084, 0.0
    %2087 = vadd.xlane.f32.xlu0 %v2086
    %v2088 = vpop.xlane.xlu0 %2087
    %v2089 = vrcp.pop %v2088
    %v2090 = vmul.f32 %v2081, %v2089
    %v2091 = vmul.f32 %v2090, 0.2
    %2093 = vrot.lane.b32.xlu0 %v2091, 118
    %v2094 = vpop.permute.xlu0 %2093
    %v2096 = vadd.f32 %v2074, %v2094
    %2097 = vst.msk [vmem:[#allocation2] sm:$0x3] %vm2049, %v2096
    // Predicated region
    $region22: #{ensemble_forward.1} parent=1 // pred_check
      _
    $region23: #{ensemble_forward.1} parent=1 // pred_check_branch
      %2099 = sbr.rel (0) target = $region25
    $region24: #{ensemble_forward.1} parent=1 // pred_region
      %s2101 = ssub.s32 32, 32
      %2102 = vsyncadd [#allocation3], %s2101
      %s2104 = sshll.u32 [#allocation2], 4
      %s2105 = int_to_ptr.vmem [resolvable:$true] %s2104
      %2107 = dma.vmem_to_hbm [thread:$0]  %s2105, 32, %s5, [#allocation3]
    $region25: #{ensemble_forward.1} parent=1 // pred_fallthru
      _
    // Predicated region
    $region26: #{ensemble_forward.1} parent=1 // pred_check
      _
    $region27: #{ensemble_forward.1} parent=1 // pred_check_branch
      %2109 = sbr.rel (0) target = $region29
    $region28: #{ensemble_forward.1} parent=1 // pred_region
      %2110 = dma.done [#allocation3], 32
    $region29: #{ensemble_forward.1} parent=1 // pred_fallthru
      _
    %2111 = vsyncpa [#allocation3], 1

</llo_original>
